<compile_context>
chip_gen: v5e
topology: v5e:2x2
jax: 0.10.0
libtpu: 0.0.40
codegen_flags: <defaults>
</compile_context>

<pallas_src>
import jax
import jax.numpy as jnp
from jax import lax
from jax.experimental import pallas as pl
from jax.experimental.pallas import tpu as pltpu


def _leaky_relu(v, slope=0.01):
    return jnp.where(v > 0, v, slope * v)


def mlp_kernel(x_ref, w1_ref, b1_ref, w2_ref, b2_ref,
               w3t_ref, b3t_ref, w4c_ref, b4_ref, o_ref):
    # fc1 (normalization already folded into w1/b1): [bt,56] @ [56,256] -> [bt,256]
    h = jnp.dot(x_ref[...], w1_ref[...], preferred_element_type=jnp.float32) + b1_ref[...]
    h = _leaky_relu(h)

    # fc2: [bt,256] @ [256,64] -> [bt,64]
    h = jnp.dot(h, w2_ref[...], preferred_element_type=jnp.float32) + b2_ref[...]
    h = _leaky_relu(h)

    # fc3 computed in transposed orientation (A @ B^T pattern):
    #   [8,64] . [bt,64]^T -> [8,bt]   (lane-dense along batch)
    h3t = lax.dot_general(
        w3t_ref[...], h,
        dimension_numbers=(((1,), (1,)), ((), ())),
        preferred_element_type=jnp.float32) + b3t_ref[...]
    h3t = _leaky_relu(h3t)

    # fc4 off the MXU: VPU multiply + 8-term sublane reduce -> [1, bt] lane-dense row.
    o_ref[...] = jnp.sum(h3t * w4c_ref[...], axis=0, keepdims=True) + b4_ref[...]


def mymodel_forward(x, input_mean, input_std, params, *, batch_tile=512):
    """x: [B, 56]. Returns [B, 1] float32."""
    B, D_in = x.shape
    assert D_in == 56

    w1, b1, w2, b2, w3, b3, w4, b4 = params
    x = x.astype(jnp.float32)
    mean = input_mean.reshape(1, D_in).astype(jnp.float32)
    std = input_std.reshape(1, D_in).astype(jnp.float32)

    # Fold the normalization into fc1 (exact algebra, zero in-kernel cost).
    w1f = w1 / std.reshape(D_in, 1)            # [56, 256]
    b1f = b1 - (mean / std) @ w1               # [1, 256]

    # Transposed tail layout so fc3/fc4 results are lane-dense.
    w3t = w3.T                                 # [8, 64]
    b3t = b3.reshape(8, 1)                     # [8, 1]
    w4c = w4.reshape(8, 1)                     # [8, 1]
    b4s = b4.reshape(1, 1)                     # [1, 1]

    # Batch tile: multiple of 128 so the lane-dense output block is unmasked; pad B up to it.
    bt = max(128, (int(batch_tile) // 128) * 128)
    Bp = ((B + bt - 1) // bt) * bt
    if Bp != B:
        x = jnp.pad(x, ((0, Bp - B), (0, 0)))
    grid = (Bp // bt,)

    def rep(shape):
        # Replicated (constant-index) block: fetched once, reused every grid step.
        return pl.BlockSpec(shape, lambda i: (0,) * len(shape))

    out_row = pl.pallas_call(
        mlp_kernel,
        out_shape=jax.ShapeDtypeStruct((1, Bp), jnp.float32),
        grid_spec=pltpu.PrefetchScalarGridSpec(
            num_scalar_prefetch=0,
            grid=grid,
            in_specs=[
                pl.BlockSpec((bt, 56), lambda i: (i, 0)),    # x tile
                rep((56, 256)), rep((1, 256)),               # fc1 (norm folded in)
                rep((256, 64)), rep((1, 64)),                # fc2
                rep((8, 64)),   rep((8, 1)),                 # fc3 (transposed)
                rep((8, 1)),    rep((1, 1)),                 # fc4 (VPU path)
            ],
            out_specs=pl.BlockSpec((1, bt), lambda i: (0, i)),  # lane-dense output row
        ),
        compiler_params=pltpu.CompilerParams(
            dimension_semantics=("parallel",)),
    )(x, w1f, b1f, w2, b2, w3t, b3t, w4c, b4s)

    # TODO(synk): for v6e/v7x, optionally feed bf16 x/w1/w2 for the two big dots
    # (keep f32 accumulation); left in f32 here to match the reference bit-closely.
    return out_row.reshape(Bp, 1)[:B]


def init_params(key):
    """Deterministic init matching the PyTorch Linear shapes (stored transposed)."""
    dims = [(56, 256), (256, 64), (64, 8), (8, 1)]
    params = []
    for fin, fout in dims:
        kw, kb, key = jax.random.split(key, 3)
        bound = 1.0 / jnp.sqrt(fin)
        w = jax.random.uniform(kw, (fin, fout), jnp.float32, -bound, bound)
        b = jax.random.uniform(kb, (1, fout), jnp.float32, -bound, bound)
        params += [w, b]
    return tuple(params)


def reference_forward(x, mean, std, params):
    w1, b1, w2, b2, w3, b3, w4, b4 = params
    h = (x - mean.reshape(1, -1)) / std.reshape(1, -1)
    h = jax.nn.leaky_relu(h @ w1 + b1, 0.01)
    h = jax.nn.leaky_relu(h @ w2 + b2, 0.01)
    h = jax.nn.leaky_relu(h @ w3 + b3, 0.01)
    return h @ w4 + b4


if __name__ == "__main__":
    key = jax.random.PRNGKey(0)
    kx, km, ks, kp = jax.random.split(key, 4)

    B = 1000  # not a multiple of the tile on purpose -> exercises padding + multi-step grid
    x = jax.random.normal(kx, (B, 56), jnp.float32)
    input_mean = jax.random.normal(km, (56,), jnp.float32)
    input_std = jax.random.uniform(ks, (56,), jnp.float32, 0.5, 1.5)
    params = init_params(kp)

    out = mymodel_forward(x, input_mean, input_std, params, batch_tile=256)
    out = jax.block_until_ready(out)

    ref = reference_forward(x, input_mean, input_std, params)
    assert out.shape == (B, 1)
    assert jnp.allclose(out, ref, atol=2e-4, rtol=2e-4), "mismatch vs reference"

    print("KERNEL_OK")
</pallas_src>

<mosaic_0001>
module attributes {stable_mosaic.version = 11 : i64} {
  func.func @mlp_kernel(%arg0: i32, %arg1: memref<256x56xf32, #tpu.memory_space<vmem>>, %arg2: memref<56x256xf32, #tpu.memory_space<vmem>>, %arg3: memref<1x256xf32, #tpu.memory_space<vmem>>, %arg4: memref<256x64xf32, #tpu.memory_space<vmem>>, %arg5: memref<1x64xf32, #tpu.memory_space<vmem>>, %arg6: memref<8x64xf32, #tpu.memory_space<vmem>>, %arg7: memref<8x1xf32, #tpu.memory_space<vmem>>, %arg8: memref<8x1xf32, #tpu.memory_space<vmem>>, %arg9: memref<1x1xf32, #tpu.memory_space<vmem>>, %arg10: memref<1x256xf32, #tpu.memory_space<vmem>>) attributes {dimension_semantics = [#tpu.dimension_semantics<parallel>], iteration_bounds = array<i64: 4>, scalar_prefetch = 0 : i64, scratch_operands = 0 : i64, tpu.core_type = #tpu.core_type<tc>, window_params = [{transform_indices = @transform_0, window_bounds = array<i64: 256, 56>}, {pipeline_mode = #tpu.pipeline_mode<synchronous>, transform_indices = @transform_1, window_bounds = array<i64: 56, 256>}, {pipeline_mode = #tpu.pipeline_mode<synchronous>, transform_indices = @transform_2, window_bounds = array<i64: 1, 256>}, {pipeline_mode = #tpu.pipeline_mode<synchronous>, transform_indices = @transform_3, window_bounds = array<i64: 256, 64>}, {pipeline_mode = #tpu.pipeline_mode<synchronous>, transform_indices = @transform_4, window_bounds = array<i64: 1, 64>}, {pipeline_mode = #tpu.pipeline_mode<synchronous>, transform_indices = @transform_5, window_bounds = array<i64: 8, 64>}, {pipeline_mode = #tpu.pipeline_mode<synchronous>, transform_indices = @transform_6, window_bounds = array<i64: 8, 1>}, {pipeline_mode = #tpu.pipeline_mode<synchronous>, transform_indices = @transform_7, window_bounds = array<i64: 8, 1>}, {pipeline_mode = #tpu.pipeline_mode<synchronous>, transform_indices = @transform_8, window_bounds = array<i64: 1, 1>}, {transform_indices = @transform_9, window_bounds = array<i64: 1, 256>}]} {
    %c0 = arith.constant 0 : index
    %c0_0 = arith.constant 0 : index
    %0 = vector.load %arg1[%c0, %c0_0] : memref<256x56xf32, #tpu.memory_space<vmem>>, vector<256x56xf32>
    %c0_1 = arith.constant 0 : index
    %c0_2 = arith.constant 0 : index
    %1 = vector.load %arg2[%c0_1, %c0_2] : memref<56x256xf32, #tpu.memory_space<vmem>>, vector<56x256xf32>
    %cst = arith.constant dense<0.000000e+00> : vector<256x256xf32>
    %2 = tpu.matmul %0, %1, %cst {dimension_numbers = #tpu.dot_dimension_numbers<[1], [0], [0], [1], [0, 0, 1, 1], [], []>} : vector<256x56xf32>, vector<56x256xf32>, vector<256x256xf32> -> vector<256x256xf32>
    %c0_3 = arith.constant 0 : index
    %c0_4 = arith.constant 0 : index
    %3 = vector.load %arg3[%c0_3, %c0_4] : memref<1x256xf32, #tpu.memory_space<vmem>>, vector<1x256xf32>
    %4 = vector.broadcast %3 : vector<1x256xf32> to vector<256x256xf32>
    %5 = arith.addf %2, %4 : vector<256x256xf32>
    %cst_5 = arith.constant 0.000000e+00 : f32
    %6 = vector.broadcast %cst_5 : f32 to vector<256x256xf32>
    %7 = arith.cmpf ogt, %5, %6 : vector<256x256xf32>
    %cst_6 = arith.constant 0.00999999977 : f32
    %8 = vector.broadcast %cst_6 : f32 to vector<256x256xf32>
    %9 = arith.mulf %8, %5 : vector<256x256xf32>
    %10 = arith.select %7, %5, %9 : vector<256x256xi1>, vector<256x256xf32>
    %c0_7 = arith.constant 0 : index
    %c0_8 = arith.constant 0 : index
    %11 = vector.load %arg4[%c0_7, %c0_8] : memref<256x64xf32, #tpu.memory_space<vmem>>, vector<256x64xf32>
    %cst_9 = arith.constant dense<0.000000e+00> : vector<256x64xf32>
    %12 = tpu.matmul %10, %11, %cst_9 {dimension_numbers = #tpu.dot_dimension_numbers<[1], [0], [0], [1], [0, 0, 1, 1], [], []>} : vector<256x256xf32>, vector<256x64xf32>, vector<256x64xf32> -> vector<256x64xf32>
    %c0_10 = arith.constant 0 : index
    %c0_11 = arith.constant 0 : index
    %13 = vector.load %arg5[%c0_10, %c0_11] : memref<1x64xf32, #tpu.memory_space<vmem>>, vector<1x64xf32>
    %14 = vector.broadcast %13 : vector<1x64xf32> to vector<256x64xf32>
    %15 = arith.addf %12, %14 : vector<256x64xf32>
    %cst_12 = arith.constant 0.000000e+00 : f32
    %16 = vector.broadcast %cst_12 : f32 to vector<256x64xf32>
    %17 = arith.cmpf ogt, %15, %16 : vector<256x64xf32>
    %cst_13 = arith.constant 0.00999999977 : f32
    %18 = vector.broadcast %cst_13 : f32 to vector<256x64xf32>
    %19 = arith.mulf %18, %15 : vector<256x64xf32>
    %20 = arith.select %17, %15, %19 : vector<256x64xi1>, vector<256x64xf32>
    %c0_14 = arith.constant 0 : index
    %c0_15 = arith.constant 0 : index
    %21 = vector.load %arg6[%c0_14, %c0_15] : memref<8x64xf32, #tpu.memory_space<vmem>>, vector<8x64xf32>
    %cst_16 = arith.constant dense<0.000000e+00> : vector<8x256xf32>
    %22 = tpu.matmul %21, %20, %cst_16 {dimension_numbers = #tpu.dot_dimension_numbers<[1], [1], [0], [0], [0, 0, 1, 0], [], []>} : vector<8x64xf32>, vector<256x64xf32>, vector<8x256xf32> -> vector<8x256xf32>
    %c0_17 = arith.constant 0 : index
    %c0_18 = arith.constant 0 : index
    %23 = vector.load %arg7[%c0_17, %c0_18] : memref<8x1xf32, #tpu.memory_space<vmem>>, vector<8x1xf32>
    %24 = vector.broadcast %23 : vector<8x1xf32> to vector<8x256xf32>
    %25 = arith.addf %22, %24 : vector<8x256xf32>
    %cst_19 = arith.constant 0.000000e+00 : f32
    %26 = vector.broadcast %cst_19 : f32 to vector<8x256xf32>
    %27 = arith.cmpf ogt, %25, %26 : vector<8x256xf32>
    %cst_20 = arith.constant 0.00999999977 : f32
    %28 = vector.broadcast %cst_20 : f32 to vector<8x256xf32>
    %29 = arith.mulf %28, %25 : vector<8x256xf32>
    %30 = arith.select %27, %25, %29 : vector<8x256xi1>, vector<8x256xf32>
    %c0_21 = arith.constant 0 : index
    %c0_22 = arith.constant 0 : index
    %31 = vector.load %arg8[%c0_21, %c0_22] : memref<8x1xf32, #tpu.memory_space<vmem>>, vector<8x1xf32>
    %32 = vector.broadcast %31 : vector<8x1xf32> to vector<8x256xf32>
    %33 = arith.mulf %30, %32 : vector<8x256xf32>
    %cst_23 = arith.constant dense<0.000000e+00> : vector<256xf32>
    %34 = vector.multi_reduction <add>, %33, %cst_23 [0] : vector<8x256xf32> to vector<256xf32>
    %35 = vector.shape_cast %34 : vector<256xf32> to vector<1x256xf32>
    %c0_24 = arith.constant 0 : index
    %c0_25 = arith.constant 0 : index
    %36 = vector.load %arg9[%c0_24, %c0_25] : memref<1x1xf32, #tpu.memory_space<vmem>>, vector<1x1xf32>
    %37 = vector.broadcast %36 : vector<1x1xf32> to vector<1x256xf32>
    %38 = arith.addf %35, %37 : vector<1x256xf32>
    %c0_26 = arith.constant 0 : index
    %c0_27 = arith.constant 0 : index
    %39 = vector.load %arg10[%c0_26, %c0_27] : memref<1x256xf32, #tpu.memory_space<vmem>>, vector<1x256xf32>
    tpu.vector_store %arg10[%c0_26, %c0_27], %38 {strides = array<i32>} : memref<1x256xf32, #tpu.memory_space<vmem>>, vector<1x256xf32>,
    return
  }
  func.func @transform_0(%arg0: i32) -> (i32, i32) {
    %c0_i32 = arith.constant 0 : i32
    %c0_i32_0 = arith.constant 0 : i32
    return %arg0, %c0_i32 : i32, i32
  }
  func.func @transform_1(%arg0: i32) -> (i32, i32) {
    %c0_i32 = arith.constant 0 : i32
    %c0_i32_0 = arith.constant 0 : i32
    %c0_i32_1 = arith.constant 0 : i32
    return %c0_i32, %c0_i32_0 : i32, i32
  }
  func.func @transform_2(%arg0: i32) -> (i32, i32) {
    %c0_i32 = arith.constant 0 : i32
    %c0_i32_0 = arith.constant 0 : i32
    %c0_i32_1 = arith.constant 0 : i32
    return %c0_i32, %c0_i32_0 : i32, i32
  }
  func.func @transform_3(%arg0: i32) -> (i32, i32) {
    %c0_i32 = arith.constant 0 : i32
    %c0_i32_0 = arith.constant 0 : i32
    %c0_i32_1 = arith.constant 0 : i32
    return %c0_i32, %c0_i32_0 : i32, i32
  }
  func.func @transform_4(%arg0: i32) -> (i32, i32) {
    %c0_i32 = arith.constant 0 : i32
    %c0_i32_0 = arith.constant 0 : i32
    %c0_i32_1 = arith.constant 0 : i32
    return %c0_i32, %c0_i32_0 : i32, i32
  }
  func.func @transform_5(%arg0: i32) -> (i32, i32) {
    %c0_i32 = arith.constant 0 : i32
    %c0_i32_0 = arith.constant 0 : i32
    %c0_i32_1 = arith.constant 0 : i32
    return %c0_i32, %c0_i32_0 : i32, i32
  }
  func.func @transform_6(%arg0: i32) -> (i32, i32) {
    %c0_i32 = arith.constant 0 : i32
    %c0_i32_0 = arith.constant 0 : i32
    %c0_i32_1 = arith.constant 0 : i32
    return %c0_i32, %c0_i32_0 : i32, i32
  }
  func.func @transform_7(%arg0: i32) -> (i32, i32) {
    %c0_i32 = arith.constant 0 : i32
    %c0_i32_0 = arith.constant 0 : i32
    %c0_i32_1 = arith.constant 0 : i32
    return %c0_i32, %c0_i32_0 : i32, i32
  }
  func.func @transform_8(%arg0: i32) -> (i32, i32) {
    %c0_i32 = arith.constant 0 : i32
    %c0_i32_0 = arith.constant 0 : i32
    %c0_i32_1 = arith.constant 0 : i32
    return %c0_i32, %c0_i32_0 : i32, i32
  }
  func.func @transform_9(%arg0: i32) -> (i32, i32) {
    %c0_i32 = arith.constant 0 : i32
    %c0_i32_0 = arith.constant 0 : i32
    return %c0_i32, %arg0 : i32, i32
  }
}

</mosaic_0001>

<llo_original>
// kernel: tpu_custom_call.1
$region0: #{tpu_custom_call.1}
  #allocation0 [shape = 'u32[]', space=smem, size = 0x4, offset = 0x4, fixed_abs, tag = 'smem constant byte address 0x4 - core index']
  #allocation1 [shape = 'u32[72,128]{1,0:T(1,128)}', space=vmem, size = 0x9000, scoped, tag = 'internal scratch']
  #allocation2 [shape = 'f32[1,1]{1,0:T(1,128)S(1)}', space=vmem, size = 0x200, scoped, tag = 'scoped memory for tpu_custom_call.1']
  %s0 = inlined_call_operand.vmem [shape: f32[1024,56], index: 0, kind: input, shape index: {}]
  %s1 = inlined_call_operand.vmem [shape: f32[56,256], index: 1, kind: input, shape index: {}]
  %s2 = inlined_call_operand.vmem [shape: f32[1,256], index: 2, kind: input, shape index: {}]
  %s3 = inlined_call_operand.vmem [shape: f32[256,64], index: 3, kind: input, shape index: {}]
  %s4 = inlined_call_operand.vmem [shape: f32[1,64], index: 4, kind: input, shape index: {}]
  %s5 = inlined_call_operand.vmem [shape: f32[8,64], index: 5, kind: input, shape index: {}]
  %s6 = inlined_call_operand.vmem [shape: f32[8,1], index: 6, kind: input, shape index: {}]
  %s7 = inlined_call_operand.vmem [shape: f32[8,1], index: 7, kind: input, shape index: {}]
  %s8 = inlined_call_operand.<no memory space> [shape: f32[1,1], index: 8, kind: input, shape index: {}]
  %s9 = inlined_call_operand.hbm [shape: f32[1,1024], index: 9, kind: output, shape index: {}]
  %s10 = sld [smem:[#allocation0]]
  $region69: #{tpu_custom_call.1} parent=0
    _
  %s12 = ssub.s32 1, %s10
  %s13 = scalar_select 0, %s12, %s10
  %v14 = vstv %s8
  %15 = vst [vmem:[#allocation2] sm:$0x1] %v14
  $region1: #{tpu_custom_call.1} parent=0
    #allocation3 [shape = 'u8[2048]{0}', space=vmem, size = 0x800, scoped, tag = 'output window, operand 0']
    #allocation4 [shape = 's32[2]{0}', space=sflag, size = 0x8, scoped, tag = 'scoped memory for tpu_custom_call.1']
    %16 = vsyncpa [#allocation4], 0
    %s17 = scalar_lea.sflag [#allocation4], 1
    %18 = vsyncpa %s17, 0
    loop: start=0, step=1, limit=6
    $region2: #{tpu_custom_call.1} parent=1 // loop_pre_header
      _
    $region3: #{tpu_custom_call.1} parent=1 // loop_header
      %s20 = sphi 0, %s24
      %p21 = scmp.ge.s32.totalorder %s20, 6
      %s30 = sphi 0, %s32
      %s33 = sphi 0, %s30
      %s34 = sphi 0, %s33
      %s50 = sphi 0, %s34
      %s54 = sphi 0, %s54
      %s56 = sphi 0, %s54
      %s57 = sphi 0, %s56
      %s71 = sphi 0, %s57
      %s75 = sphi 0, %s75
      %s77 = sphi 0, %s75
      %s78 = sphi 0, %s77
      %s92 = sphi 0, %s78
      %s96 = sphi 0, %s96
      %s98 = sphi 0, %s96
      %s99 = sphi 0, %s98
      %s113 = sphi 0, %s99
      %s117 = sphi 0, %s117
      %s119 = sphi 0, %s117
      %s120 = sphi 0, %s119
      %s134 = sphi 0, %s120
      %s138 = sphi 0, %s138
      %s140 = sphi 0, %s138
      %s141 = sphi 0, %s140
      %s155 = sphi 0, %s141
      %s159 = sphi 0, %s159
      %s161 = sphi 0, %s159
      %s162 = sphi 0, %s161
      %s176 = sphi 0, %s162
      %s180 = sphi 0, %s180
      %s182 = sphi 0, %s180
      %s183 = sphi 0, %s182
      %s197 = sphi 0, %s183
      %s201 = sphi 0, %s201
      %s203 = sphi 0, %s201
      %s204 = sphi 0, %s203
      %s218 = sphi 0, %s204
      %s224 = sphi 0, %s226
      %s227 = sphi 0, %s224
      %s228 = sphi 0, %s227
      %s244 = sphi 0, %s228
    $region4: #{tpu_custom_call.1} parent=1 // loop_header_branch
      %23 = sbr.rel (%p21) target = $region8
    $region5: #{tpu_custom_call.1} parent=1 // loop_body
      %s25 = ssub.s32 %s20, 1
      %s26 = ssub.s32 %s20, 2
      %s27 = sadd.s32 %s20, 1
      %s28 = ssub.s32 %s20, %s27
      %p29 = scmp.eq.s32.totalorder %s28, 0
      %s31 = sadd.s32 %s30, 1
      %s32 = scalar_select %p29, %s30, %s31
      %p35 = pneg %p29
      %p36 = scmp.eq.s32.totalorder %s20, 3
      %p37 = por %p35, %p36
      %p38 = scmp.ne.s32.totalorder %s30, %s33
      %p39 = scmp.eq.s32.totalorder %s20, 0
      %p40 = por %p38, %p39
      %p41 = scmp.ne.s32.totalorder %s30, %s33
      %p42 = scmp.eq.s32.totalorder %s25, 3
      %p43 = por %p41, %p42
      %p44 = scmp.ne.s32.totalorder %s33, %s34
      %p45 = scmp.eq.s32.totalorder %s25, 0
      %p46 = por %p44, %p45
      %p47 = scmp.ne.s32.totalorder %s33, %s34
      %p48 = scmp.eq.s32.totalorder %s26, 3
      %p49 = por %p47, %p48
      %p51 = scmp.ne.s32.totalorder %s34, %s50
      %p52 = scmp.eq.s32.totalorder %s26, 0
      %p53 = por %p51, %p52
      %s55 = sadd.s32 %s54, 1
      %p58 = scmp.eq.s32.totalorder %s20, 3
      %p59 = scmp.ne.s32.totalorder %s54, %s56
      %p60 = scmp.eq.s32.totalorder %s20, 0
      %p61 = por %p59, %p60
      %p62 = scmp.ne.s32.totalorder %s54, %s56
      %p63 = scmp.eq.s32.totalorder %s25, 3
      %p64 = por %p62, %p63
      %p65 = scmp.ne.s32.totalorder %s56, %s57
      %p66 = scmp.eq.s32.totalorder %s25, 0
      %p67 = por %p65, %p66
      %p68 = scmp.ne.s32.totalorder %s56, %s57
      %p69 = scmp.eq.s32.totalorder %s26, 3
      %p70 = por %p68, %p69
      %p72 = scmp.ne.s32.totalorder %s57, %s71
      %p73 = scmp.eq.s32.totalorder %s26, 0
      %p74 = por %p72, %p73
      %s76 = sadd.s32 %s75, 1
      %p79 = scmp.eq.s32.totalorder %s20, 3
      %p80 = scmp.ne.s32.totalorder %s75, %s77
      %p81 = scmp.eq.s32.totalorder %s20, 0
      %p82 = por %p80, %p81
      %p83 = scmp.ne.s32.totalorder %s75, %s77
      %p84 = scmp.eq.s32.totalorder %s25, 3
      %p85 = por %p83, %p84
      %p86 = scmp.ne.s32.totalorder %s77, %s78
      %p87 = scmp.eq.s32.totalorder %s25, 0
      %p88 = por %p86, %p87
      %p89 = scmp.ne.s32.totalorder %s77, %s78
      %p90 = scmp.eq.s32.totalorder %s26, 3
      %p91 = por %p89, %p90
      %p93 = scmp.ne.s32.totalorder %s78, %s92
      %p94 = scmp.eq.s32.totalorder %s26, 0
      %p95 = por %p93, %p94
      %s97 = sadd.s32 %s96, 1
      %p100 = scmp.eq.s32.totalorder %s20, 3
      %p101 = scmp.ne.s32.totalorder %s96, %s98
      %p102 = scmp.eq.s32.totalorder %s20, 0
      %p103 = por %p101, %p102
      %p104 = scmp.ne.s32.totalorder %s96, %s98
      %p105 = scmp.eq.s32.totalorder %s25, 3
      %p106 = por %p104, %p105
      %p107 = scmp.ne.s32.totalorder %s98, %s99
      %p108 = scmp.eq.s32.totalorder %s25, 0
      %p109 = por %p107, %p108
      %p110 = scmp.ne.s32.totalorder %s98, %s99
      %p111 = scmp.eq.s32.totalorder %s26, 3
      %p112 = por %p110, %p111
      %p114 = scmp.ne.s32.totalorder %s99, %s113
      %p115 = scmp.eq.s32.totalorder %s26, 0
      %p116 = por %p114, %p115
      %s118 = sadd.s32 %s117, 1
      %p121 = scmp.eq.s32.totalorder %s20, 3
      %p122 = scmp.ne.s32.totalorder %s117, %s119
      %p123 = scmp.eq.s32.totalorder %s20, 0
      %p124 = por %p122, %p123
      %p125 = scmp.ne.s32.totalorder %s117, %s119
      %p126 = scmp.eq.s32.totalorder %s25, 3
      %p127 = por %p125, %p126
      %p128 = scmp.ne.s32.totalorder %s119, %s120
      %p129 = scmp.eq.s32.totalorder %s25, 0
      %p130 = por %p128, %p129
      %p131 = scmp.ne.s32.totalorder %s119, %s120
      %p132 = scmp.eq.s32.totalorder %s26, 3
      %p133 = por %p131, %p132
      %p135 = scmp.ne.s32.totalorder %s120, %s134
      %p136 = scmp.eq.s32.totalorder %s26, 0
      %p137 = por %p135, %p136
      %s139 = sadd.s32 %s138, 1
      %p142 = scmp.eq.s32.totalorder %s20, 3
      %p143 = scmp.ne.s32.totalorder %s138, %s140
      %p144 = scmp.eq.s32.totalorder %s20, 0
      %p145 = por %p143, %p144
      %p146 = scmp.ne.s32.totalorder %s138, %s140
      %p147 = scmp.eq.s32.totalorder %s25, 3
      %p148 = por %p146, %p147
      %p149 = scmp.ne.s32.totalorder %s140, %s141
      %p150 = scmp.eq.s32.totalorder %s25, 0
      %p151 = por %p149, %p150
      %p152 = scmp.ne.s32.totalorder %s140, %s141
      %p153 = scmp.eq.s32.totalorder %s26, 3
      %p154 = por %p152, %p153
      %p156 = scmp.ne.s32.totalorder %s141, %s155
      %p157 = scmp.eq.s32.totalorder %s26, 0
      %p158 = por %p156, %p157
      %s160 = sadd.s32 %s159, 1
      %p163 = scmp.eq.s32.totalorder %s20, 3
      %p164 = scmp.ne.s32.totalorder %s159, %s161
      %p165 = scmp.eq.s32.totalorder %s20, 0
      %p166 = por %p164, %p165
      %p167 = scmp.ne.s32.totalorder %s159, %s161
      %p168 = scmp.eq.s32.totalorder %s25, 3
      %p169 = por %p167, %p168
      %p170 = scmp.ne.s32.totalorder %s161, %s162
      %p171 = scmp.eq.s32.totalorder %s25, 0
      %p172 = por %p170, %p171
      %p173 = scmp.ne.s32.totalorder %s161, %s162
      %p174 = scmp.eq.s32.totalorder %s26, 3
      %p175 = por %p173, %p174
      %p177 = scmp.ne.s32.totalorder %s162, %s176
      %p178 = scmp.eq.s32.totalorder %s26, 0
      %p179 = por %p177, %p178
      %s181 = sadd.s32 %s180, 1
      %p184 = scmp.eq.s32.totalorder %s20, 3
      %p185 = scmp.ne.s32.totalorder %s180, %s182
      %p186 = scmp.eq.s32.totalorder %s20, 0
      %p187 = por %p185, %p186
      %p188 = scmp.ne.s32.totalorder %s180, %s182
      %p189 = scmp.eq.s32.totalorder %s25, 3
      %p190 = por %p188, %p189
      %p191 = scmp.ne.s32.totalorder %s182, %s183
      %p192 = scmp.eq.s32.totalorder %s25, 0
      %p193 = por %p191, %p192
      %p194 = scmp.ne.s32.totalorder %s182, %s183
      %p195 = scmp.eq.s32.totalorder %s26, 3
      %p196 = por %p194, %p195
      %p198 = scmp.ne.s32.totalorder %s183, %s197
      %p199 = scmp.eq.s32.totalorder %s26, 0
      %p200 = por %p198, %p199
      %s202 = sadd.s32 %s201, 1
      %p205 = scmp.eq.s32.totalorder %s20, 3
      %p206 = scmp.ne.s32.totalorder %s201, %s203
      %p207 = scmp.eq.s32.totalorder %s20, 0
      %p208 = por %p206, %p207
      %p209 = scmp.ne.s32.totalorder %s201, %s203
      %p210 = scmp.eq.s32.totalorder %s25, 3
      %p211 = por %p209, %p210
      %p212 = scmp.ne.s32.totalorder %s203, %s204
      %p213 = scmp.eq.s32.totalorder %s25, 0
      %p214 = por %p212, %p213
      %p215 = scmp.ne.s32.totalorder %s203, %s204
      %p216 = scmp.eq.s32.totalorder %s26, 3
      %p217 = por %p215, %p216
      %p219 = scmp.ne.s32.totalorder %s204, %s218
      %p220 = scmp.eq.s32.totalorder %s26, 0
      %p221 = por %p219, %p220
      %s222 = ssub.s32 %s20, %s27
      %p223 = scmp.eq.s32.totalorder %s222, 0
      %s225 = sadd.s32 %s224, 1
      %s226 = scalar_select %p223, %s224, %s225
      %p229 = pneg %p223
      %p230 = scmp.eq.s32.totalorder %s20, 3
      %p231 = por %p229, %p230
      %p232 = scmp.ne.s32.totalorder %s224, %s227
      %p233 = scmp.eq.s32.totalorder %s20, 0
      %p234 = por %p232, %p233
      %p235 = scmp.ne.s32.totalorder %s224, %s227
      %p236 = scmp.eq.s32.totalorder %s25, 3
      %p237 = por %p235, %p236
      %p238 = scmp.ne.s32.totalorder %s227, %s228
      %p239 = scmp.eq.s32.totalorder %s25, 0
      %p240 = por %p238, %p239
      %p241 = scmp.ne.s32.totalorder %s227, %s228
      %p242 = scmp.eq.s32.totalorder %s26, 3
      %p243 = por %p241, %p242
      %p245 = scmp.ne.s32.totalorder %s228, %s244
      %p246 = scmp.eq.s32.totalorder %s26, 0
      %p247 = por %p245, %p246
      %p248 = scmp.le.s32.totalorder 1, %s20
      %p249 = scmp.lt.s32.totalorder %s20, 5
      %p250 = pnand %p248, %p249
      %p251 = pneg %p250
      // Predicated region
      $region9: #{tpu_custom_call.1} parent=5 // pred_check
        _
      $region10: #{tpu_custom_call.1} parent=5 // pred_check_branch
        %253 = sbr.rel (%p250) target = $region12
      $region11: #{tpu_custom_call.1} parent=5 // pred_region
        %s254 = ssub.s32 %s20, 1
        // Predicated region
        $region13: #{tpu_custom_call.1} parent=11 // pred_check
          %p255 = pneg %p67
        $region14: #{tpu_custom_call.1} parent=11 // pred_check_branch
          %257 = sbr.rel (%p255) target = $region16
        $region15: #{tpu_custom_call.1} parent=11 // pred_region
          _
        $region16: #{tpu_custom_call.1} parent=11 // pred_fallthru
          _
        // Predicated region
        $region17: #{tpu_custom_call.1} parent=11 // pred_check
          %p258 = pneg %p88
        $region18: #{tpu_custom_call.1} parent=11 // pred_check_branch
          %260 = sbr.rel (%p258) target = $region20
        $region19: #{tpu_custom_call.1} parent=11 // pred_region
          _
        $region20: #{tpu_custom_call.1} parent=11 // pred_fallthru
          _
        // Predicated region
        $region21: #{tpu_custom_call.1} parent=11 // pred_check
          %p261 = pneg %p109
        $region22: #{tpu_custom_call.1} parent=11 // pred_check_branch
          %263 = sbr.rel (%p261) target = $region24
        $region23: #{tpu_custom_call.1} parent=11 // pred_region
          _
        $region24: #{tpu_custom_call.1} parent=11 // pred_fallthru
          _
        // Predicated region
        $region25: #{tpu_custom_call.1} parent=11 // pred_check
          %p264 = pneg %p130
        $region26: #{tpu_custom_call.1} parent=11 // pred_check_branch
          %266 = sbr.rel (%p264) target = $region28
        $region27: #{tpu_custom_call.1} parent=11 // pred_region
          _
        $region28: #{tpu_custom_call.1} parent=11 // pred_fallthru
          _
        // Predicated region
        $region29: #{tpu_custom_call.1} parent=11 // pred_check
          %p267 = pneg %p151
        $region30: #{tpu_custom_call.1} parent=11 // pred_check_branch
          %269 = sbr.rel (%p267) target = $region32
        $region31: #{tpu_custom_call.1} parent=11 // pred_region
          _
        $region32: #{tpu_custom_call.1} parent=11 // pred_fallthru
          _
        // Predicated region
        $region33: #{tpu_custom_call.1} parent=11 // pred_check
          %p270 = pneg %p172
        $region34: #{tpu_custom_call.1} parent=11 // pred_check_branch
          %272 = sbr.rel (%p270) target = $region36
        $region35: #{tpu_custom_call.1} parent=11 // pred_region
          _
        $region36: #{tpu_custom_call.1} parent=11 // pred_fallthru
          _
        // Predicated region
        $region37: #{tpu_custom_call.1} parent=11 // pred_check
          %p273 = pneg %p193
        $region38: #{tpu_custom_call.1} parent=11 // pred_check_branch
          %275 = sbr.rel (%p273) target = $region40
        $region39: #{tpu_custom_call.1} parent=11 // pred_region
          _
        $region40: #{tpu_custom_call.1} parent=11 // pred_fallthru
          _
        // Predicated region
        $region41: #{tpu_custom_call.1} parent=11 // pred_check
          %p276 = pneg %p214
        $region42: #{tpu_custom_call.1} parent=11 // pred_check_branch
          %278 = sbr.rel (%p276) target = $region44
        $region43: #{tpu_custom_call.1} parent=11 // pred_region
          _
        $region44: #{tpu_custom_call.1} parent=11 // pred_fallthru
          _
      $region12: #{tpu_custom_call.1} parent=5 // pred_fallthru
        _
      %p279 = scmp.lt.s32.totalorder %s20, 4
      // Predicated region
      $region45: #{tpu_custom_call.1} parent=5 // pred_check
        %p280 = pneg %p279
      $region46: #{tpu_custom_call.1} parent=5 // pred_check_branch
        %282 = sbr.rel (%p280) target = $region48
      $region47: #{tpu_custom_call.1} parent=5 // pred_region
        // Predicated region
        $region49: #{tpu_custom_call.1} parent=47 // pred_check
          %p283 = pneg %p40
        $region50: #{tpu_custom_call.1} parent=47 // pred_check_branch
          %285 = sbr.rel (%p283) target = $region52
        $region51: #{tpu_custom_call.1} parent=47 // pred_region
          %s286 = smul.u32 32, %s20
          %p287 = scmp.lt.s32.totalorder %s286, 127
          %s288 = scalar_select %p287, %s286, 127
          %s289 = smul.addr %s288, 8
          %s290 = scalar_lea.vmem %s0, %s289
          %s291 = smul.u32 32, %s20
        $region52: #{tpu_custom_call.1} parent=47 // pred_fallthru
          _
      $region48: #{tpu_custom_call.1} parent=5 // pred_fallthru
        _
      %p292 = scmp.le.s32.totalorder 1, %s20
      %p293 = scmp.lt.s32.totalorder %s20, 5
      %p294 = pnand %p292, %p293
      %p295 = pneg %p294
      // Predicated region
      $region53: #{tpu_custom_call.1} parent=5 // pred_check
        _
      $region54: #{tpu_custom_call.1} parent=5 // pred_check_branch
        %297 = sbr.rel (%p294) target = $region56
      $region55: #{tpu_custom_call.1} parent=5 // pred_region
        %s298 = ssub.s32 %s20, 1
        %s299 = smul.u32 32, %s25
        %p300 = scmp.lt.s32.totalorder %s299, 127
        %s301 = scalar_select %p300, %s299, 127
        %s302 = smul.addr %s301, 8
        %s303 = scalar_lea.vmem %s0, %s302
        %p304 = pneg %p46
        %p305 = pneg %p43
        %p306 = pneg %p67
        %p307 = pneg %p64
        %p308 = pneg %p88
        %p309 = pneg %p85
        %p310 = pneg %p109
        %p311 = pneg %p106
        %p312 = pneg %p130
        %p313 = pneg %p127
        %p314 = pneg %p151
        %p315 = pneg %p148
        %p316 = pneg %p172
        %p317 = pneg %p169
        %p318 = pneg %p193
        %p319 = pneg %p190
        %p320 = pneg %p214
        %p321 = pneg %p211
        %p322 = pneg %p240
        %p323 = pneg %p237
        %s324 = sand.u32 %s227, 1
        %s325 = scalar_lea.sflag [#allocation4], %s324
        %s326 = sand.u32 %s227, 1
        %s327 = smul.addr %s326, 2
        %s328 = scalar_lea.vmem [#allocation3], %s327
        %s329 = smul.u32 32, %s25
        %p330 = scmp.lt.s32.totalorder %s329, 127
        %s331 = scalar_select %p330, %s329, 127
        %s332 = smul.addr %s331, 8
        %s333 = scalar_lea.vmem %s0, %s332
        %s334 = smul.u32 32, %s25
        %s335 = smul.u32 2, %s25
        %v336 = vld [vmem:[%s333] sm:$0xff]
        %v337 = vld [vmem:[%s333 + $0x8] sm:$0xff]
        %v338 = vld [vmem:[%s333 + $0x10] sm:$0xff]
        %v339 = vld [vmem:[%s333 + $0x18] sm:$0xff]
        %v340 = vld [vmem:[%s333 + $0x20] sm:$0xff]
        %v341 = vld [vmem:[%s333 + $0x28] sm:$0xff]
        %v342 = vld [vmem:[%s333 + $0x30] sm:$0xff]
        %v343 = vld [vmem:[%s333 + $0x38] sm:$0xff]
        %v344 = vld [vmem:[%s333 + $0x40] sm:$0xff]
        %v345 = vld [vmem:[%s333 + $0x48] sm:$0xff]
        %v346 = vld [vmem:[%s333 + $0x50] sm:$0xff]
        %v347 = vld [vmem:[%s333 + $0x58] sm:$0xff]
        %v348 = vld [vmem:[%s333 + $0x60] sm:$0xff]
        %v349 = vld [vmem:[%s333 + $0x68] sm:$0xff]
        %v350 = vld [vmem:[%s333 + $0x70] sm:$0xff]
        %v351 = vld [vmem:[%s333 + $0x78] sm:$0xff]
        %v352 = vld [vmem:[%s333 + $0x80] sm:$0xff]
        %v353 = vld [vmem:[%s333 + $0x88] sm:$0xff]
        %v354 = vld [vmem:[%s333 + $0x90] sm:$0xff]
        %v355 = vld [vmem:[%s333 + $0x98] sm:$0xff]
        %v356 = vld [vmem:[%s333 + $0xa0] sm:$0xff]
        %v357 = vld [vmem:[%s333 + $0xa8] sm:$0xff]
        %v358 = vld [vmem:[%s333 + $0xb0] sm:$0xff]
        %v359 = vld [vmem:[%s333 + $0xb8] sm:$0xff]
        %v360 = vld [vmem:[%s333 + $0xc0] sm:$0xff]
        %v361 = vld [vmem:[%s333 + $0xc8] sm:$0xff]
        %v362 = vld [vmem:[%s333 + $0xd0] sm:$0xff]
        %v363 = vld [vmem:[%s333 + $0xd8] sm:$0xff]
        %v364 = vld [vmem:[%s333 + $0xe0] sm:$0xff]
        %v365 = vld [vmem:[%s333 + $0xe8] sm:$0xff]
        %v366 = vld [vmem:[%s333 + $0xf0] sm:$0xff]
        %v367 = vld [vmem:[%s333 + $0xf8] sm:$0xff]
        %v368 = vld [vmem:[%s1] sm:$0xff]
        %v369 = vld [vmem:[%s1 + $0x8] sm:$0xff]
        %v370 = vld [vmem:[%s1 + $0x10] sm:$0xff]
        %v371 = vld [vmem:[%s1 + $0x18] sm:$0xff]
        %v372 = vld [vmem:[%s1 + $0x20] sm:$0xff]
        %v373 = vld [vmem:[%s1 + $0x28] sm:$0xff]
        %v374 = vld [vmem:[%s1 + $0x30] sm:$0xff]
        %v375 = vld [vmem:[%s1 + $0x38] sm:$0xff]
        %v376 = vld [vmem:[%s1 + $0x40] sm:$0xff]
        %v377 = vld [vmem:[%s1 + $0x48] sm:$0xff]
        %v378 = vld [vmem:[%s1 + $0x50] sm:$0xff]
        %v379 = vld [vmem:[%s1 + $0x58] sm:$0xff]
        %v380 = vld [vmem:[%s1 + $0x60] sm:$0xff]
        %v381 = vld [vmem:[%s1 + $0x68] sm:$0xff]
        %v382 = vld [vmem:[%s2] sm:$0x3]
        %v384 = vperm.slane %v382, 0
        %v385 = vperm.slane %v382, 1
        %vm388 = vcmask 457728
        %v390 = vsel %vm388, %v336, 0
        %v393 = vsel %vm388, %v337, 0
        %v396 = vsel %vm388, %v338, 0
        %v399 = vsel %vm388, %v339, 0
        %v402 = vsel %vm388, %v340, 0
        %v405 = vsel %vm388, %v341, 0
        %v408 = vsel %vm388, %v342, 0
        %v411 = vsel %vm388, %v343, 0
        %v414 = vsel %vm388, %v344, 0
        %v417 = vsel %vm388, %v345, 0
        %v420 = vsel %vm388, %v346, 0
        %v423 = vsel %vm388, %v347, 0
        %v426 = vsel %vm388, %v348, 0
        %v429 = vsel %vm388, %v349, 0
        %v432 = vsel %vm388, %v350, 0
        %v435 = vsel %vm388, %v351, 0
        %v438 = vsel %vm388, %v352, 0
        %v441 = vsel %vm388, %v353, 0
        %v444 = vsel %vm388, %v354, 0
        %v447 = vsel %vm388, %v355, 0
        %v450 = vsel %vm388, %v356, 0
        %v453 = vsel %vm388, %v357, 0
        %v456 = vsel %vm388, %v358, 0
        %v459 = vsel %vm388, %v359, 0
        %v462 = vsel %vm388, %v360, 0
        %v465 = vsel %vm388, %v361, 0
        %v468 = vsel %vm388, %v362, 0
        %v471 = vsel %vm388, %v363, 0
        %v474 = vsel %vm388, %v364, 0
        %v477 = vsel %vm388, %v365, 0
        %v480 = vsel %vm388, %v366, 0
        %v483 = vsel %vm388, %v367, 0
        %485 = vmatpush.msra.mxu0 0.0
        %486 = vmatpush.msra.mxu0 0.0
        %487 = vmatpush.msra.mxu0 0.0
        %488 = vmatpush.msra.mxu0 0.0
        %489 = vmatpush.msra.mxu0 0.0
        %490 = vmatpush.msra.mxu0 0.0
        %491 = vmatpush.msra.mxu0 0.0
        %492 = vmatpush.msra.mxu0 0.0
        %493 = vmatpush.msra.mxu0 0.0
        %494 = vmatpush.msra.mxu0 %v380
        %495 = vmatpush.msra.mxu0 %v378
        %496 = vmatpush.msra.mxu0 %v376
        %497 = vmatpush.msra.mxu0 %v374
        %498 = vmatpush.msra.mxu0 %v372
        %499 = vmatpush.msra.mxu0 %v370
        %500 = vmatpush.msra.mxu0 %v368
        %501 = vmatmul.f32.gmra.mxu0 %v390
        %v502 = vpop.f32.mrf.mxu0
        %v503 = vadd.f32 %v384, %v502
        %504 = vmatmul.f32.gmra.mxu0 %v393
        %v505 = vpop.f32.mrf.mxu0
        %v506 = vadd.f32 %v384, %v505
        %507 = vmatmul.f32.gmra.mxu0 %v396
        %v508 = vpop.f32.mrf.mxu0
        %v509 = vadd.f32 %v384, %v508
        %510 = vmatmul.f32.gmra.mxu0 %v399
        %v511 = vpop.f32.mrf.mxu0
        %v512 = vadd.f32 %v384, %v511
        %513 = vmatmul.f32.gmra.mxu0 %v402
        %v514 = vpop.f32.mrf.mxu0
        %v515 = vadd.f32 %v384, %v514
        %516 = vmatmul.f32.gmra.mxu0 %v405
        %v517 = vpop.f32.mrf.mxu0
        %v518 = vadd.f32 %v384, %v517
        %519 = vmatmul.f32.gmra.mxu0 %v408
        %v520 = vpop.f32.mrf.mxu0
        %v521 = vadd.f32 %v384, %v520
        %522 = vmatmul.f32.gmra.mxu0 %v411
        %v523 = vpop.f32.mrf.mxu0
        %v524 = vadd.f32 %v384, %v523
        %525 = vmatmul.f32.gmra.mxu0 %v414
        %v526 = vpop.f32.mrf.mxu0
        %v527 = vadd.f32 %v384, %v526
        %528 = vmatmul.f32.gmra.mxu0 %v417
        %v529 = vpop.f32.mrf.mxu0
        %v530 = vadd.f32 %v384, %v529
        %531 = vmatmul.f32.gmra.mxu0 %v420
        %v532 = vpop.f32.mrf.mxu0
        %v533 = vadd.f32 %v384, %v532
        %534 = vmatmul.f32.gmra.mxu0 %v423
        %v535 = vpop.f32.mrf.mxu0
        %v536 = vadd.f32 %v384, %v535
        %537 = vmatmul.f32.gmra.mxu0 %v426
        %v538 = vpop.f32.mrf.mxu0
        %v539 = vadd.f32 %v384, %v538
        %540 = vmatmul.f32.gmra.mxu0 %v429
        %v541 = vpop.f32.mrf.mxu0
        %v542 = vadd.f32 %v384, %v541
        %543 = vmatmul.f32.gmra.mxu0 %v432
        %v544 = vpop.f32.mrf.mxu0
        %v545 = vadd.f32 %v384, %v544
        %546 = vmatmul.f32.gmra.mxu0 %v435
        %v547 = vpop.f32.mrf.mxu0
        %v548 = vadd.f32 %v384, %v547
        %549 = vmatmul.f32.gmra.mxu0 %v438
        %v550 = vpop.f32.mrf.mxu0
        %v551 = vadd.f32 %v384, %v550
        %552 = vmatmul.f32.gmra.mxu0 %v441
        %v553 = vpop.f32.mrf.mxu0
        %v554 = vadd.f32 %v384, %v553
        %555 = vmatmul.f32.gmra.mxu0 %v444
        %v556 = vpop.f32.mrf.mxu0
        %v557 = vadd.f32 %v384, %v556
        %558 = vmatmul.f32.gmra.mxu0 %v447
        %v559 = vpop.f32.mrf.mxu0
        %v560 = vadd.f32 %v384, %v559
        %561 = vmatmul.f32.gmra.mxu0 %v450
        %v562 = vpop.f32.mrf.mxu0
        %v563 = vadd.f32 %v384, %v562
        %564 = vmatmul.f32.gmra.mxu0 %v453
        %v565 = vpop.f32.mrf.mxu0
        %v566 = vadd.f32 %v384, %v565
        %567 = vmatmul.f32.gmra.mxu0 %v456
        %v568 = vpop.f32.mrf.mxu0
        %v569 = vadd.f32 %v384, %v568
        %570 = vmatmul.f32.gmra.mxu0 %v459
        %v571 = vpop.f32.mrf.mxu0
        %v572 = vadd.f32 %v384, %v571
        %573 = vmatmul.f32.gmra.mxu0 %v462
        %v574 = vpop.f32.mrf.mxu0
        %v575 = vadd.f32 %v384, %v574
        %576 = vmatmul.f32.gmra.mxu0 %v465
        %v577 = vpop.f32.mrf.mxu0
        %v578 = vadd.f32 %v384, %v577
        %579 = vmatmul.f32.gmra.mxu0 %v468
        %v580 = vpop.f32.mrf.mxu0
        %v581 = vadd.f32 %v384, %v580
        %582 = vmatmul.f32.gmra.mxu0 %v471
        %v583 = vpop.f32.mrf.mxu0
        %v584 = vadd.f32 %v384, %v583
        %585 = vmatmul.f32.gmra.mxu0 %v474
        %v586 = vpop.f32.mrf.mxu0
        %v587 = vadd.f32 %v384, %v586
        %588 = vmatmul.f32.gmra.mxu0 %v477
        %v589 = vpop.f32.mrf.mxu0
        %v590 = vadd.f32 %v384, %v589
        %591 = vmatmul.f32.gmra.mxu0 %v480
        %v592 = vpop.f32.mrf.mxu0
        %v593 = vadd.f32 %v384, %v592
        %594 = vmatmul.f32.gmra.mxu0 %v483
        %v595 = vpop.f32.mrf.mxu0
        %v596 = vadd.f32 %v384, %v595
        %597 = vdwg.mxu0
        %598 = vmatpush.msra.mxu0 0.0
        %599 = vmatpush.msra.mxu0 0.0
        %600 = vmatpush.msra.mxu0 0.0
        %601 = vmatpush.msra.mxu0 0.0
        %602 = vmatpush.msra.mxu0 0.0
        %603 = vmatpush.msra.mxu0 0.0
        %604 = vmatpush.msra.mxu0 0.0
        %605 = vmatpush.msra.mxu0 0.0
        %606 = vmatpush.msra.mxu0 0.0
        %607 = vmatpush.msra.mxu0 %v381
        %608 = vmatpush.msra.mxu0 %v379
        %609 = vmatpush.msra.mxu0 %v377
        %610 = vmatpush.msra.mxu0 %v375
        %611 = vmatpush.msra.mxu0 %v373
        %612 = vmatpush.msra.mxu0 %v371
        %613 = vmatpush.msra.mxu0 %v369
        %614 = vmatmul.f32.gmra.mxu0 %v390
        %v615 = vpop.f32.mrf.mxu0
        %v616 = vadd.f32 %v385, %v615
        %617 = vmatmul.f32.gmra.mxu0 %v393
        %v618 = vpop.f32.mrf.mxu0
        %v619 = vadd.f32 %v385, %v618
        %620 = vmatmul.f32.gmra.mxu0 %v396
        %v621 = vpop.f32.mrf.mxu0
        %v622 = vadd.f32 %v385, %v621
        %623 = vmatmul.f32.gmra.mxu0 %v399
        %v624 = vpop.f32.mrf.mxu0
        %v625 = vadd.f32 %v385, %v624
        %626 = vmatmul.f32.gmra.mxu0 %v402
        %v627 = vpop.f32.mrf.mxu0
        %v628 = vadd.f32 %v385, %v627
        %629 = vmatmul.f32.gmra.mxu0 %v405
        %v630 = vpop.f32.mrf.mxu0
        %v631 = vadd.f32 %v385, %v630
        %632 = vmatmul.f32.gmra.mxu0 %v408
        %v633 = vpop.f32.mrf.mxu0
        %v634 = vadd.f32 %v385, %v633
        %635 = vmatmul.f32.gmra.mxu0 %v411
        %v636 = vpop.f32.mrf.mxu0
        %v637 = vadd.f32 %v385, %v636
        %638 = vmatmul.f32.gmra.mxu0 %v414
        %v639 = vpop.f32.mrf.mxu0
        %v640 = vadd.f32 %v385, %v639
        %641 = vmatmul.f32.gmra.mxu0 %v417
        %v642 = vpop.f32.mrf.mxu0
        %v643 = vadd.f32 %v385, %v642
        %644 = vmatmul.f32.gmra.mxu0 %v420
        %v645 = vpop.f32.mrf.mxu0
        %v646 = vadd.f32 %v385, %v645
        %647 = vmatmul.f32.gmra.mxu0 %v423
        %v648 = vpop.f32.mrf.mxu0
        %v649 = vadd.f32 %v385, %v648
        %650 = vmatmul.f32.gmra.mxu0 %v426
        %v651 = vpop.f32.mrf.mxu0
        %v652 = vadd.f32 %v385, %v651
        %653 = vmatmul.f32.gmra.mxu0 %v429
        %v654 = vpop.f32.mrf.mxu0
        %v655 = vadd.f32 %v385, %v654
        %656 = vmatmul.f32.gmra.mxu0 %v432
        %v657 = vpop.f32.mrf.mxu0
        %v658 = vadd.f32 %v385, %v657
        %659 = vmatmul.f32.gmra.mxu0 %v435
        %v660 = vpop.f32.mrf.mxu0
        %v661 = vadd.f32 %v385, %v660
        %662 = vmatmul.f32.gmra.mxu0 %v438
        %v663 = vpop.f32.mrf.mxu0
        %v664 = vadd.f32 %v385, %v663
        %665 = vmatmul.f32.gmra.mxu0 %v441
        %v666 = vpop.f32.mrf.mxu0
        %v667 = vadd.f32 %v385, %v666
        %668 = vmatmul.f32.gmra.mxu0 %v444
        %v669 = vpop.f32.mrf.mxu0
        %v670 = vadd.f32 %v385, %v669
        %671 = vmatmul.f32.gmra.mxu0 %v447
        %v672 = vpop.f32.mrf.mxu0
        %v673 = vadd.f32 %v385, %v672
        %674 = vmatmul.f32.gmra.mxu0 %v450
        %v675 = vpop.f32.mrf.mxu0
        %v676 = vadd.f32 %v385, %v675
        %677 = vmatmul.f32.gmra.mxu0 %v453
        %v678 = vpop.f32.mrf.mxu0
        %v679 = vadd.f32 %v385, %v678
        %680 = vmatmul.f32.gmra.mxu0 %v456
        %v681 = vpop.f32.mrf.mxu0
        %v682 = vadd.f32 %v385, %v681
        %683 = vmatmul.f32.gmra.mxu0 %v459
        %v684 = vpop.f32.mrf.mxu0
        %v685 = vadd.f32 %v385, %v684
        %686 = vmatmul.f32.gmra.mxu0 %v462
        %v687 = vpop.f32.mrf.mxu0
        %v688 = vadd.f32 %v385, %v687
        %689 = vmatmul.f32.gmra.mxu0 %v465
        %v690 = vpop.f32.mrf.mxu0
        %v691 = vadd.f32 %v385, %v690
        %692 = vmatmul.f32.gmra.mxu0 %v468
        %v693 = vpop.f32.mrf.mxu0
        %v694 = vadd.f32 %v385, %v693
        %695 = vmatmul.f32.gmra.mxu0 %v471
        %v696 = vpop.f32.mrf.mxu0
        %v697 = vadd.f32 %v385, %v696
        %698 = vmatmul.f32.gmra.mxu0 %v474
        %v699 = vpop.f32.mrf.mxu0
        %v700 = vadd.f32 %v385, %v699
        %701 = vmatmul.f32.gmra.mxu0 %v477
        %v702 = vpop.f32.mrf.mxu0
        %v703 = vadd.f32 %v385, %v702
        %704 = vmatmul.f32.gmra.mxu0 %v480
        %v705 = vpop.f32.mrf.mxu0
        %v706 = vadd.f32 %v385, %v705
        %707 = vmatmul.f32.gmra.mxu0 %v483
        %v708 = vpop.f32.mrf.mxu0
        %v709 = vadd.f32 %v385, %v708
        %710 = vdwg.mxu0
        %vm711 = vcmp.gt.f32.partialorder %v503, 0.0
        %vm712 = vcmp.gt.f32.partialorder %v616, 0.0
        %vm713 = vcmp.gt.f32.partialorder %v506, 0.0
        %vm714 = vcmp.gt.f32.partialorder %v619, 0.0
        %vm715 = vcmp.gt.f32.partialorder %v509, 0.0
        %vm716 = vcmp.gt.f32.partialorder %v622, 0.0
        %vm717 = vcmp.gt.f32.partialorder %v512, 0.0
        %vm718 = vcmp.gt.f32.partialorder %v625, 0.0
        %vm719 = vcmp.gt.f32.partialorder %v515, 0.0
        %vm720 = vcmp.gt.f32.partialorder %v628, 0.0
        %vm721 = vcmp.gt.f32.partialorder %v518, 0.0
        %vm722 = vcmp.gt.f32.partialorder %v631, 0.0
        %vm723 = vcmp.gt.f32.partialorder %v521, 0.0
        %vm724 = vcmp.gt.f32.partialorder %v634, 0.0
        %vm725 = vcmp.gt.f32.partialorder %v524, 0.0
        %vm726 = vcmp.gt.f32.partialorder %v637, 0.0
        %vm727 = vcmp.gt.f32.partialorder %v527, 0.0
        %vm728 = vcmp.gt.f32.partialorder %v640, 0.0
        %vm729 = vcmp.gt.f32.partialorder %v530, 0.0
        %vm730 = vcmp.gt.f32.partialorder %v643, 0.0
        %vm731 = vcmp.gt.f32.partialorder %v533, 0.0
        %vm732 = vcmp.gt.f32.partialorder %v646, 0.0
        %vm733 = vcmp.gt.f32.partialorder %v536, 0.0
        %vm734 = vcmp.gt.f32.partialorder %v649, 0.0
        %vm735 = vcmp.gt.f32.partialorder %v539, 0.0
        %vm736 = vcmp.gt.f32.partialorder %v652, 0.0
        %vm737 = vcmp.gt.f32.partialorder %v542, 0.0
        %vm738 = vcmp.gt.f32.partialorder %v655, 0.0
        %vm739 = vcmp.gt.f32.partialorder %v545, 0.0
        %vm740 = vcmp.gt.f32.partialorder %v658, 0.0
        %vm741 = vcmp.gt.f32.partialorder %v548, 0.0
        %vm742 = vcmp.gt.f32.partialorder %v661, 0.0
        %vm743 = vcmp.gt.f32.partialorder %v551, 0.0
        %vm744 = vcmp.gt.f32.partialorder %v664, 0.0
        %vm745 = vcmp.gt.f32.partialorder %v554, 0.0
        %vm746 = vcmp.gt.f32.partialorder %v667, 0.0
        %vm747 = vcmp.gt.f32.partialorder %v557, 0.0
        %vm748 = vcmp.gt.f32.partialorder %v670, 0.0
        %vm749 = vcmp.gt.f32.partialorder %v560, 0.0
        %vm750 = vcmp.gt.f32.partialorder %v673, 0.0
        %vm751 = vcmp.gt.f32.partialorder %v563, 0.0
        %vm752 = vcmp.gt.f32.partialorder %v676, 0.0
        %vm753 = vcmp.gt.f32.partialorder %v566, 0.0
        %vm754 = vcmp.gt.f32.partialorder %v679, 0.0
        %vm755 = vcmp.gt.f32.partialorder %v569, 0.0
        %vm756 = vcmp.gt.f32.partialorder %v682, 0.0
        %vm757 = vcmp.gt.f32.partialorder %v572, 0.0
        %vm758 = vcmp.gt.f32.partialorder %v685, 0.0
        %vm759 = vcmp.gt.f32.partialorder %v575, 0.0
        %vm760 = vcmp.gt.f32.partialorder %v688, 0.0
        %vm761 = vcmp.gt.f32.partialorder %v578, 0.0
        %vm762 = vcmp.gt.f32.partialorder %v691, 0.0
        %vm763 = vcmp.gt.f32.partialorder %v581, 0.0
        %vm764 = vcmp.gt.f32.partialorder %v694, 0.0
        %vm765 = vcmp.gt.f32.partialorder %v584, 0.0
        %vm766 = vcmp.gt.f32.partialorder %v697, 0.0
        %vm767 = vcmp.gt.f32.partialorder %v587, 0.0
        %vm768 = vcmp.gt.f32.partialorder %v700, 0.0
        %vm769 = vcmp.gt.f32.partialorder %v590, 0.0
        %vm770 = vcmp.gt.f32.partialorder %v703, 0.0
        %vm771 = vcmp.gt.f32.partialorder %v593, 0.0
        %vm772 = vcmp.gt.f32.partialorder %v706, 0.0
        %vm773 = vcmp.gt.f32.partialorder %v596, 0.0
        %vm774 = vcmp.gt.f32.partialorder %v709, 0.0
        %v775 = vmul.f32 %v503, 0.01
        %v776 = vmul.f32 %v616, 0.01
        %v777 = vmul.f32 %v506, 0.01
        %v778 = vmul.f32 %v619, 0.01
        %v779 = vmul.f32 %v509, 0.01
        %v780 = vmul.f32 %v622, 0.01
        %v781 = vmul.f32 %v512, 0.01
        %v782 = vmul.f32 %v625, 0.01
        %v783 = vmul.f32 %v515, 0.01
        %v784 = vmul.f32 %v628, 0.01
        %v785 = vmul.f32 %v518, 0.01
        %v786 = vmul.f32 %v631, 0.01
        %v787 = vmul.f32 %v521, 0.01
        %v788 = vmul.f32 %v634, 0.01
        %v789 = vmul.f32 %v524, 0.01
        %v790 = vmul.f32 %v637, 0.01
        %v791 = vmul.f32 %v527, 0.01
        %v792 = vmul.f32 %v640, 0.01
        %v793 = vmul.f32 %v530, 0.01
        %v794 = vmul.f32 %v643, 0.01
        %v795 = vmul.f32 %v533, 0.01
        %v796 = vmul.f32 %v646, 0.01
        %v797 = vmul.f32 %v536, 0.01
        %v798 = vmul.f32 %v649, 0.01
        %v799 = vmul.f32 %v539, 0.01
        %v800 = vmul.f32 %v652, 0.01
        %v801 = vmul.f32 %v542, 0.01
        %v802 = vmul.f32 %v655, 0.01
        %v803 = vmul.f32 %v545, 0.01
        %v804 = vmul.f32 %v658, 0.01
        %v805 = vmul.f32 %v548, 0.01
        %v806 = vmul.f32 %v661, 0.01
        %v807 = vmul.f32 %v551, 0.01
        %v808 = vmul.f32 %v664, 0.01
        %v809 = vmul.f32 %v554, 0.01
        %v810 = vmul.f32 %v667, 0.01
        %v811 = vmul.f32 %v557, 0.01
        %v812 = vmul.f32 %v670, 0.01
        %v813 = vmul.f32 %v560, 0.01
        %v814 = vmul.f32 %v673, 0.01
        %v815 = vmul.f32 %v563, 0.01
        %v816 = vmul.f32 %v676, 0.01
        %v817 = vmul.f32 %v566, 0.01
        %v818 = vmul.f32 %v679, 0.01
        %v819 = vmul.f32 %v569, 0.01
        %v820 = vmul.f32 %v682, 0.01
        %v821 = vmul.f32 %v572, 0.01
        %v822 = vmul.f32 %v685, 0.01
        %v823 = vmul.f32 %v575, 0.01
        %v824 = vmul.f32 %v688, 0.01
        %v825 = vmul.f32 %v578, 0.01
        %v826 = vmul.f32 %v691, 0.01
        %v827 = vmul.f32 %v581, 0.01
        %v828 = vmul.f32 %v694, 0.01
        %v829 = vmul.f32 %v584, 0.01
        %v830 = vmul.f32 %v697, 0.01
        %v831 = vmul.f32 %v587, 0.01
        %v832 = vmul.f32 %v700, 0.01
        %v833 = vmul.f32 %v590, 0.01
        %v834 = vmul.f32 %v703, 0.01
        %v835 = vmul.f32 %v593, 0.01
        %v836 = vmul.f32 %v706, 0.01
        %v837 = vmul.f32 %v596, 0.01
        %v838 = vmul.f32 %v709, 0.01
        %v839 = vsel %vm711, %v503, %v775
        %v840 = vsel %vm712, %v616, %v776
        %v841 = vsel %vm713, %v506, %v777
        %v842 = vsel %vm714, %v619, %v778
        %v843 = vsel %vm715, %v509, %v779
        %v844 = vsel %vm716, %v622, %v780
        %v845 = vsel %vm717, %v512, %v781
        %v846 = vsel %vm718, %v625, %v782
        %v847 = vsel %vm719, %v515, %v783
        %v848 = vsel %vm720, %v628, %v784
        %v849 = vsel %vm721, %v518, %v785
        %v850 = vsel %vm722, %v631, %v786
        %v851 = vsel %vm723, %v521, %v787
        %v852 = vsel %vm724, %v634, %v788
        %v853 = vsel %vm725, %v524, %v789
        %v854 = vsel %vm726, %v637, %v790
        %v855 = vsel %vm727, %v527, %v791
        %v856 = vsel %vm728, %v640, %v792
        %v857 = vsel %vm729, %v530, %v793
        %v858 = vsel %vm730, %v643, %v794
        %v859 = vsel %vm731, %v533, %v795
        %v860 = vsel %vm732, %v646, %v796
        %v861 = vsel %vm733, %v536, %v797
        %v862 = vsel %vm734, %v649, %v798
        %v863 = vsel %vm735, %v539, %v799
        %v864 = vsel %vm736, %v652, %v800
        %v865 = vsel %vm737, %v542, %v801
        %v866 = vsel %vm738, %v655, %v802
        %v867 = vsel %vm739, %v545, %v803
        %v868 = vsel %vm740, %v658, %v804
        %v869 = vsel %vm741, %v548, %v805
        %v870 = vsel %vm742, %v661, %v806
        %v871 = vsel %vm743, %v551, %v807
        %v872 = vsel %vm744, %v664, %v808
        %v873 = vsel %vm745, %v554, %v809
        %v874 = vsel %vm746, %v667, %v810
        %v875 = vsel %vm747, %v557, %v811
        %v876 = vsel %vm748, %v670, %v812
        %v877 = vsel %vm749, %v560, %v813
        %v878 = vsel %vm750, %v673, %v814
        %v879 = vsel %vm751, %v563, %v815
        %v880 = vsel %vm752, %v676, %v816
        %v881 = vsel %vm753, %v566, %v817
        %v882 = vsel %vm754, %v679, %v818
        %v883 = vsel %vm755, %v569, %v819
        %v884 = vsel %vm756, %v682, %v820
        %v885 = vsel %vm757, %v572, %v821
        %v886 = vsel %vm758, %v685, %v822
        %v887 = vsel %vm759, %v575, %v823
        %v888 = vsel %vm760, %v688, %v824
        %v889 = vsel %vm761, %v578, %v825
        %v890 = vsel %vm762, %v691, %v826
        %v891 = vsel %vm763, %v581, %v827
        %v892 = vsel %vm764, %v694, %v828
        %v893 = vsel %vm765, %v584, %v829
        %v894 = vsel %vm766, %v697, %v830
        %v895 = vsel %vm767, %v587, %v831
        %v896 = vsel %vm768, %v700, %v832
        %v897 = vsel %vm769, %v590, %v833
        %v898 = vsel %vm770, %v703, %v834
        %v899 = vsel %vm771, %v593, %v835
        %v900 = vsel %vm772, %v706, %v836
        %v901 = vsel %vm773, %v596, %v837
        %v902 = vsel %vm774, %v709, %v838
        %v903 = vld [vmem:[%s3] sm:$0xff]
        %v904 = vld [vmem:[%s3 + $0x8] sm:$0xff]
        %v905 = vld [vmem:[%s3 + $0x10] sm:$0xff]
        %v906 = vld [vmem:[%s3 + $0x18] sm:$0xff]
        %v907 = vld [vmem:[%s3 + $0x20] sm:$0xff]
        %v908 = vld [vmem:[%s3 + $0x28] sm:$0xff]
        %v909 = vld [vmem:[%s3 + $0x30] sm:$0xff]
        %v910 = vld [vmem:[%s3 + $0x38] sm:$0xff]
        %v911 = vld [vmem:[%s3 + $0x40] sm:$0xff]
        %v912 = vld [vmem:[%s3 + $0x48] sm:$0xff]
        %v913 = vld [vmem:[%s3 + $0x50] sm:$0xff]
        %v914 = vld [vmem:[%s3 + $0x58] sm:$0xff]
        %v915 = vld [vmem:[%s3 + $0x60] sm:$0xff]
        %v916 = vld [vmem:[%s3 + $0x68] sm:$0xff]
        %v917 = vld [vmem:[%s3 + $0x70] sm:$0xff]
        %v918 = vld [vmem:[%s3 + $0x78] sm:$0xff]
        %v919 = vld [vmem:[%s3 + $0x80] sm:$0xff]
        %v920 = vld [vmem:[%s3 + $0x88] sm:$0xff]
        %v921 = vld [vmem:[%s3 + $0x90] sm:$0xff]
        %v922 = vld [vmem:[%s3 + $0x98] sm:$0xff]
        %v923 = vld [vmem:[%s3 + $0xa0] sm:$0xff]
        %v924 = vld [vmem:[%s3 + $0xa8] sm:$0xff]
        %v925 = vld [vmem:[%s3 + $0xb0] sm:$0xff]
        %v926 = vld [vmem:[%s3 + $0xb8] sm:$0xff]
        %v927 = vld [vmem:[%s3 + $0xc0] sm:$0xff]
        %v928 = vld [vmem:[%s3 + $0xc8] sm:$0xff]
        %v929 = vld [vmem:[%s3 + $0xd0] sm:$0xff]
        %v930 = vld [vmem:[%s3 + $0xd8] sm:$0xff]
        %v931 = vld [vmem:[%s3 + $0xe0] sm:$0xff]
        %v932 = vld [vmem:[%s3 + $0xe8] sm:$0xff]
        %v933 = vld [vmem:[%s3 + $0xf0] sm:$0xff]
        %v934 = vld [vmem:[%s3 + $0xf8] sm:$0xff]
        %v935 = vld [vmem:[%s4] sm:$0x1]
        %v937 = vperm.slane %v935, 0
        %939 = vmatpush.msra.mxu0 %v918
        %940 = vmatpush.msra.mxu0 %v917
        %941 = vmatpush.msra.mxu0 %v916
        %942 = vmatpush.msra.mxu0 %v915
        %943 = vmatpush.msra.mxu0 %v914
        %944 = vmatpush.msra.mxu0 %v913
        %945 = vmatpush.msra.mxu0 %v912
        %946 = vmatpush.msra.mxu0 %v911
        %947 = vmatpush.msra.mxu0 %v910
        %948 = vmatpush.msra.mxu0 %v909
        %949 = vmatpush.msra.mxu0 %v908
        %950 = vmatpush.msra.mxu0 %v907
        %951 = vmatpush.msra.mxu0 %v906
        %952 = vmatpush.msra.mxu0 %v905
        %953 = vmatpush.msra.mxu0 %v904
        %954 = vmatpush.msra.mxu0 %v903
        %955 = vmatmul.f32.gmra.mxu0 %v839
        %v956 = vpop.f32.mrf.mxu0
        %v957 = vadd.f32 %v937, %v956
        %958 = vmatmul.f32.gmra.mxu0 %v841
        %v959 = vpop.f32.mrf.mxu0
        %v960 = vadd.f32 %v937, %v959
        %961 = vmatmul.f32.gmra.mxu0 %v843
        %v962 = vpop.f32.mrf.mxu0
        %v963 = vadd.f32 %v937, %v962
        %964 = vmatmul.f32.gmra.mxu0 %v845
        %v965 = vpop.f32.mrf.mxu0
        %v966 = vadd.f32 %v937, %v965
        %967 = vmatmul.f32.gmra.mxu0 %v847
        %v968 = vpop.f32.mrf.mxu0
        %v969 = vadd.f32 %v937, %v968
        %970 = vmatmul.f32.gmra.mxu0 %v849
        %v971 = vpop.f32.mrf.mxu0
        %v972 = vadd.f32 %v937, %v971
        %973 = vmatmul.f32.gmra.mxu0 %v851
        %v974 = vpop.f32.mrf.mxu0
        %v975 = vadd.f32 %v937, %v974
        %976 = vmatmul.f32.gmra.mxu0 %v853
        %v977 = vpop.f32.mrf.mxu0
        %v978 = vadd.f32 %v937, %v977
        %979 = vmatmul.f32.gmra.mxu0 %v855
        %v980 = vpop.f32.mrf.mxu0
        %v981 = vadd.f32 %v937, %v980
        %982 = vmatmul.f32.gmra.mxu0 %v857
        %v983 = vpop.f32.mrf.mxu0
        %v984 = vadd.f32 %v937, %v983
        %985 = vmatmul.f32.gmra.mxu0 %v859
        %v986 = vpop.f32.mrf.mxu0
        %v987 = vadd.f32 %v937, %v986
        %988 = vmatmul.f32.gmra.mxu0 %v861
        %v989 = vpop.f32.mrf.mxu0
        %v990 = vadd.f32 %v937, %v989
        %991 = vmatmul.f32.gmra.mxu0 %v863
        %v992 = vpop.f32.mrf.mxu0
        %v993 = vadd.f32 %v937, %v992
        %994 = vmatmul.f32.gmra.mxu0 %v865
        %v995 = vpop.f32.mrf.mxu0
        %v996 = vadd.f32 %v937, %v995
        %997 = vmatmul.f32.gmra.mxu0 %v867
        %v998 = vpop.f32.mrf.mxu0
        %v999 = vadd.f32 %v937, %v998
        %1000 = vmatmul.f32.gmra.mxu0 %v869
        %v1001 = vpop.f32.mrf.mxu0
        %v1002 = vadd.f32 %v937, %v1001
        %1003 = vmatmul.f32.gmra.mxu0 %v871
        %v1004 = vpop.f32.mrf.mxu0
        %v1005 = vadd.f32 %v937, %v1004
        %1006 = vmatmul.f32.gmra.mxu0 %v873
        %v1007 = vpop.f32.mrf.mxu0
        %v1008 = vadd.f32 %v937, %v1007
        %1009 = vmatmul.f32.gmra.mxu0 %v875
        %v1010 = vpop.f32.mrf.mxu0
        %v1011 = vadd.f32 %v937, %v1010
        %1012 = vmatmul.f32.gmra.mxu0 %v877
        %v1013 = vpop.f32.mrf.mxu0
        %v1014 = vadd.f32 %v937, %v1013
        %1015 = vmatmul.f32.gmra.mxu0 %v879
        %v1016 = vpop.f32.mrf.mxu0
        %v1017 = vadd.f32 %v937, %v1016
        %1018 = vmatmul.f32.gmra.mxu0 %v881
        %v1019 = vpop.f32.mrf.mxu0
        %v1020 = vadd.f32 %v937, %v1019
        %1021 = vmatmul.f32.gmra.mxu0 %v883
        %v1022 = vpop.f32.mrf.mxu0
        %v1023 = vadd.f32 %v937, %v1022
        %1024 = vmatmul.f32.gmra.mxu0 %v885
        %v1025 = vpop.f32.mrf.mxu0
        %v1026 = vadd.f32 %v937, %v1025
        %1027 = vmatmul.f32.gmra.mxu0 %v887
        %v1028 = vpop.f32.mrf.mxu0
        %v1029 = vadd.f32 %v937, %v1028
        %1030 = vmatmul.f32.gmra.mxu0 %v889
        %v1031 = vpop.f32.mrf.mxu0
        %v1032 = vadd.f32 %v937, %v1031
        %1033 = vmatmul.f32.gmra.mxu0 %v891
        %v1034 = vpop.f32.mrf.mxu0
        %v1035 = vadd.f32 %v937, %v1034
        %1036 = vmatmul.f32.gmra.mxu0 %v893
        %v1037 = vpop.f32.mrf.mxu0
        %v1038 = vadd.f32 %v937, %v1037
        %1039 = vmatmul.f32.gmra.mxu0 %v895
        %v1040 = vpop.f32.mrf.mxu0
        %v1041 = vadd.f32 %v937, %v1040
        %1042 = vmatmul.f32.gmra.mxu0 %v897
        %v1043 = vpop.f32.mrf.mxu0
        %v1044 = vadd.f32 %v937, %v1043
        %1045 = vmatmul.f32.gmra.mxu0 %v899
        %v1046 = vpop.f32.mrf.mxu0
        %v1047 = vadd.f32 %v937, %v1046
        %1048 = vmatmul.f32.gmra.mxu0 %v901
        %v1049 = vpop.f32.mrf.mxu0
        %v1050 = vadd.f32 %v937, %v1049
        %1051 = vdwg.mxu0
        %1052 = vmatpush.msra.mxu0 %v934
        %1053 = vmatpush.msra.mxu0 %v933
        %1054 = vmatpush.msra.mxu0 %v932
        %1055 = vmatpush.msra.mxu0 %v931
        %1056 = vmatpush.msra.mxu0 %v930
        %1057 = vmatpush.msra.mxu0 %v929
        %1058 = vmatpush.msra.mxu0 %v928
        %1059 = vmatpush.msra.mxu0 %v927
        %1060 = vmatpush.msra.mxu0 %v926
        %1061 = vmatpush.msra.mxu0 %v925
        %1062 = vmatpush.msra.mxu0 %v924
        %1063 = vmatpush.msra.mxu0 %v923
        %1064 = vmatpush.msra.mxu0 %v922
        %1065 = vmatpush.msra.mxu0 %v921
        %1066 = vmatpush.msra.mxu0 %v920
        %1067 = vmatpush.msra.mxu0 %v919
        %1068 = vmatmul.f32.gmra.mxu0 %v840
        %v1069 = vpop.f32.mrf.mxu0
        %v1070 = vadd.f32 %v957, %v1069
        %1071 = vmatmul.f32.gmra.mxu0 %v842
        %v1072 = vpop.f32.mrf.mxu0
        %v1073 = vadd.f32 %v960, %v1072
        %1074 = vmatmul.f32.gmra.mxu0 %v844
        %v1075 = vpop.f32.mrf.mxu0
        %v1076 = vadd.f32 %v963, %v1075
        %1077 = vmatmul.f32.gmra.mxu0 %v846
        %v1078 = vpop.f32.mrf.mxu0
        %v1079 = vadd.f32 %v966, %v1078
        %1080 = vmatmul.f32.gmra.mxu0 %v848
        %v1081 = vpop.f32.mrf.mxu0
        %v1082 = vadd.f32 %v969, %v1081
        %1083 = vmatmul.f32.gmra.mxu0 %v850
        %v1084 = vpop.f32.mrf.mxu0
        %v1085 = vadd.f32 %v972, %v1084
        %1086 = vmatmul.f32.gmra.mxu0 %v852
        %v1087 = vpop.f32.mrf.mxu0
        %v1088 = vadd.f32 %v975, %v1087
        %1089 = vmatmul.f32.gmra.mxu0 %v854
        %v1090 = vpop.f32.mrf.mxu0
        %v1091 = vadd.f32 %v978, %v1090
        %1092 = vmatmul.f32.gmra.mxu0 %v856
        %v1093 = vpop.f32.mrf.mxu0
        %v1094 = vadd.f32 %v981, %v1093
        %1095 = vmatmul.f32.gmra.mxu0 %v858
        %v1096 = vpop.f32.mrf.mxu0
        %v1097 = vadd.f32 %v984, %v1096
        %1098 = vmatmul.f32.gmra.mxu0 %v860
        %v1099 = vpop.f32.mrf.mxu0
        %v1100 = vadd.f32 %v987, %v1099
        %1101 = vmatmul.f32.gmra.mxu0 %v862
        %v1102 = vpop.f32.mrf.mxu0
        %v1103 = vadd.f32 %v990, %v1102
        %1104 = vmatmul.f32.gmra.mxu0 %v864
        %v1105 = vpop.f32.mrf.mxu0
        %v1106 = vadd.f32 %v993, %v1105
        %1107 = vmatmul.f32.gmra.mxu0 %v866
        %v1108 = vpop.f32.mrf.mxu0
        %v1109 = vadd.f32 %v996, %v1108
        %1110 = vmatmul.f32.gmra.mxu0 %v868
        %v1111 = vpop.f32.mrf.mxu0
        %v1112 = vadd.f32 %v999, %v1111
        %1113 = vmatmul.f32.gmra.mxu0 %v870
        %v1114 = vpop.f32.mrf.mxu0
        %v1115 = vadd.f32 %v1002, %v1114
        %1116 = vmatmul.f32.gmra.mxu0 %v872
        %v1117 = vpop.f32.mrf.mxu0
        %v1118 = vadd.f32 %v1005, %v1117
        %1119 = vmatmul.f32.gmra.mxu0 %v874
        %v1120 = vpop.f32.mrf.mxu0
        %v1121 = vadd.f32 %v1008, %v1120
        %1122 = vmatmul.f32.gmra.mxu0 %v876
        %v1123 = vpop.f32.mrf.mxu0
        %v1124 = vadd.f32 %v1011, %v1123
        %1125 = vmatmul.f32.gmra.mxu0 %v878
        %v1126 = vpop.f32.mrf.mxu0
        %v1127 = vadd.f32 %v1014, %v1126
        %1128 = vmatmul.f32.gmra.mxu0 %v880
        %v1129 = vpop.f32.mrf.mxu0
        %v1130 = vadd.f32 %v1017, %v1129
        %1131 = vmatmul.f32.gmra.mxu0 %v882
        %v1132 = vpop.f32.mrf.mxu0
        %v1133 = vadd.f32 %v1020, %v1132
        %1134 = vmatmul.f32.gmra.mxu0 %v884
        %v1135 = vpop.f32.mrf.mxu0
        %v1136 = vadd.f32 %v1023, %v1135
        %1137 = vmatmul.f32.gmra.mxu0 %v886
        %v1138 = vpop.f32.mrf.mxu0
        %v1139 = vadd.f32 %v1026, %v1138
        %1140 = vmatmul.f32.gmra.mxu0 %v888
        %v1141 = vpop.f32.mrf.mxu0
        %v1142 = vadd.f32 %v1029, %v1141
        %1143 = vmatmul.f32.gmra.mxu0 %v890
        %v1144 = vpop.f32.mrf.mxu0
        %v1145 = vadd.f32 %v1032, %v1144
        %1146 = vmatmul.f32.gmra.mxu0 %v892
        %v1147 = vpop.f32.mrf.mxu0
        %v1148 = vadd.f32 %v1035, %v1147
        %1149 = vmatmul.f32.gmra.mxu0 %v894
        %v1150 = vpop.f32.mrf.mxu0
        %v1151 = vadd.f32 %v1038, %v1150
        %1152 = vmatmul.f32.gmra.mxu0 %v896
        %v1153 = vpop.f32.mrf.mxu0
        %v1154 = vadd.f32 %v1041, %v1153
        %1155 = vmatmul.f32.gmra.mxu0 %v898
        %v1156 = vpop.f32.mrf.mxu0
        %v1157 = vadd.f32 %v1044, %v1156
        %1158 = vmatmul.f32.gmra.mxu0 %v900
        %v1159 = vpop.f32.mrf.mxu0
        %v1160 = vadd.f32 %v1047, %v1159
        %1161 = vmatmul.f32.gmra.mxu0 %v902
        %v1162 = vpop.f32.mrf.mxu0
        %v1163 = vadd.f32 %v1050, %v1162
        %1164 = vdwg.mxu0
        %vm1165 = vcmp.gt.f32.partialorder %v1070, 0.0
        %vm1166 = vcmp.gt.f32.partialorder %v1073, 0.0
        %vm1167 = vcmp.gt.f32.partialorder %v1076, 0.0
        %vm1168 = vcmp.gt.f32.partialorder %v1079, 0.0
        %vm1169 = vcmp.gt.f32.partialorder %v1082, 0.0
        %vm1170 = vcmp.gt.f32.partialorder %v1085, 0.0
        %vm1171 = vcmp.gt.f32.partialorder %v1088, 0.0
        %vm1172 = vcmp.gt.f32.partialorder %v1091, 0.0
        %vm1173 = vcmp.gt.f32.partialorder %v1094, 0.0
        %vm1174 = vcmp.gt.f32.partialorder %v1097, 0.0
        %vm1175 = vcmp.gt.f32.partialorder %v1100, 0.0
        %vm1176 = vcmp.gt.f32.partialorder %v1103, 0.0
        %vm1177 = vcmp.gt.f32.partialorder %v1106, 0.0
        %vm1178 = vcmp.gt.f32.partialorder %v1109, 0.0
        %vm1179 = vcmp.gt.f32.partialorder %v1112, 0.0
        %vm1180 = vcmp.gt.f32.partialorder %v1115, 0.0
        %vm1181 = vcmp.gt.f32.partialorder %v1118, 0.0
        %vm1182 = vcmp.gt.f32.partialorder %v1121, 0.0
        %vm1183 = vcmp.gt.f32.partialorder %v1124, 0.0
        %vm1184 = vcmp.gt.f32.partialorder %v1127, 0.0
        %vm1185 = vcmp.gt.f32.partialorder %v1130, 0.0
        %vm1186 = vcmp.gt.f32.partialorder %v1133, 0.0
        %vm1187 = vcmp.gt.f32.partialorder %v1136, 0.0
        %vm1188 = vcmp.gt.f32.partialorder %v1139, 0.0
        %vm1189 = vcmp.gt.f32.partialorder %v1142, 0.0
        %vm1190 = vcmp.gt.f32.partialorder %v1145, 0.0
        %vm1191 = vcmp.gt.f32.partialorder %v1148, 0.0
        %vm1192 = vcmp.gt.f32.partialorder %v1151, 0.0
        %vm1193 = vcmp.gt.f32.partialorder %v1154, 0.0
        %vm1194 = vcmp.gt.f32.partialorder %v1157, 0.0
        %vm1195 = vcmp.gt.f32.partialorder %v1160, 0.0
        %vm1196 = vcmp.gt.f32.partialorder %v1163, 0.0
        %v1197 = vmul.f32 %v1070, 0.01
        %v1198 = vmul.f32 %v1073, 0.01
        %v1199 = vmul.f32 %v1076, 0.01
        %v1200 = vmul.f32 %v1079, 0.01
        %v1201 = vmul.f32 %v1082, 0.01
        %v1202 = vmul.f32 %v1085, 0.01
        %v1203 = vmul.f32 %v1088, 0.01
        %v1204 = vmul.f32 %v1091, 0.01
        %v1205 = vmul.f32 %v1094, 0.01
        %v1206 = vmul.f32 %v1097, 0.01
        %v1207 = vmul.f32 %v1100, 0.01
        %v1208 = vmul.f32 %v1103, 0.01
        %v1209 = vmul.f32 %v1106, 0.01
        %v1210 = vmul.f32 %v1109, 0.01
        %v1211 = vmul.f32 %v1112, 0.01
        %v1212 = vmul.f32 %v1115, 0.01
        %v1213 = vmul.f32 %v1118, 0.01
        %v1214 = vmul.f32 %v1121, 0.01
        %v1215 = vmul.f32 %v1124, 0.01
        %v1216 = vmul.f32 %v1127, 0.01
        %v1217 = vmul.f32 %v1130, 0.01
        %v1218 = vmul.f32 %v1133, 0.01
        %v1219 = vmul.f32 %v1136, 0.01
        %v1220 = vmul.f32 %v1139, 0.01
        %v1221 = vmul.f32 %v1142, 0.01
        %v1222 = vmul.f32 %v1145, 0.01
        %v1223 = vmul.f32 %v1148, 0.01
        %v1224 = vmul.f32 %v1151, 0.01
        %v1225 = vmul.f32 %v1154, 0.01
        %v1226 = vmul.f32 %v1157, 0.01
        %v1227 = vmul.f32 %v1160, 0.01
        %v1228 = vmul.f32 %v1163, 0.01
        %v1229 = vsel %vm1165, %v1070, %v1197
        %v1230 = vsel %vm1166, %v1073, %v1198
        %v1231 = vsel %vm1167, %v1076, %v1199
        %v1232 = vsel %vm1168, %v1079, %v1200
        %v1233 = vsel %vm1169, %v1082, %v1201
        %v1234 = vsel %vm1170, %v1085, %v1202
        %v1235 = vsel %vm1171, %v1088, %v1203
        %v1236 = vsel %vm1172, %v1091, %v1204
        %v1237 = vsel %vm1173, %v1094, %v1205
        %v1238 = vsel %vm1174, %v1097, %v1206
        %v1239 = vsel %vm1175, %v1100, %v1207
        %v1240 = vsel %vm1176, %v1103, %v1208
        %v1241 = vsel %vm1177, %v1106, %v1209
        %v1242 = vsel %vm1178, %v1109, %v1210
        %v1243 = vsel %vm1179, %v1112, %v1211
        %v1244 = vsel %vm1180, %v1115, %v1212
        %v1245 = vsel %vm1181, %v1118, %v1213
        %v1246 = vsel %vm1182, %v1121, %v1214
        %v1247 = vsel %vm1183, %v1124, %v1215
        %v1248 = vsel %vm1184, %v1127, %v1216
        %v1249 = vsel %vm1185, %v1130, %v1217
        %v1250 = vsel %vm1186, %v1133, %v1218
        %v1251 = vsel %vm1187, %v1136, %v1219
        %v1252 = vsel %vm1188, %v1139, %v1220
        %v1253 = vsel %vm1189, %v1142, %v1221
        %v1254 = vsel %vm1190, %v1145, %v1222
        %v1255 = vsel %vm1191, %v1148, %v1223
        %v1256 = vsel %vm1192, %v1151, %v1224
        %v1257 = vsel %vm1193, %v1154, %v1225
        %v1258 = vsel %vm1194, %v1157, %v1226
        %v1259 = vsel %vm1195, %v1160, %v1227
        %v1260 = vsel %vm1196, %v1163, %v1228
        %v1261 = vld [vmem:[%s5] sm:$0xff]
        %v1262 = vld [vmem:[%s6] sm:$0xff]
        %1264 = vset.pattern.permute.xlu0 0
        %1265 = vperm.xlu0 %1264, %v1262
        %v1266 = vpop.permute.xlu0 %1265
        %vm1268 = vcmask 523264
        %v1270 = vsel %vm1268, %v1261, 0
        %v1273 = vsel %vm1268, %v1229, 0
        %v1276 = vsel %vm1268, %v1230, 0
        %v1279 = vsel %vm1268, %v1231, 0
        %v1282 = vsel %vm1268, %v1232, 0
        %v1285 = vsel %vm1268, %v1233, 0
        %v1288 = vsel %vm1268, %v1234, 0
        %v1291 = vsel %vm1268, %v1235, 0
        %v1294 = vsel %vm1268, %v1236, 0
        %v1297 = vsel %vm1268, %v1237, 0
        %v1300 = vsel %vm1268, %v1238, 0
        %v1303 = vsel %vm1268, %v1239, 0
        %v1306 = vsel %vm1268, %v1240, 0
        %v1309 = vsel %vm1268, %v1241, 0
        %v1312 = vsel %vm1268, %v1242, 0
        %v1315 = vsel %vm1268, %v1243, 0
        %v1318 = vsel %vm1268, %v1244, 0
        %v1321 = vsel %vm1268, %v1245, 0
        %v1324 = vsel %vm1268, %v1246, 0
        %v1327 = vsel %vm1268, %v1247, 0
        %v1330 = vsel %vm1268, %v1248, 0
        %v1333 = vsel %vm1268, %v1249, 0
        %v1336 = vsel %vm1268, %v1250, 0
        %v1339 = vsel %vm1268, %v1251, 0
        %v1342 = vsel %vm1268, %v1252, 0
        %v1345 = vsel %vm1268, %v1253, 0
        %v1348 = vsel %vm1268, %v1254, 0
        %v1351 = vsel %vm1268, %v1255, 0
        %v1354 = vsel %vm1268, %v1256, 0
        %v1357 = vsel %vm1268, %v1257, 0
        %v1360 = vsel %vm1268, %v1258, 0
        %v1363 = vsel %vm1268, %v1259, 0
        %v1366 = vsel %vm1268, %v1260, 0
        %1368 = vmatpush.xpose.msra.mxu0 %v1318
        %1369 = vmatpush.xpose.msra.mxu0 %v1315
        %1370 = vmatpush.xpose.msra.mxu0 %v1312
        %1371 = vmatpush.xpose.msra.mxu0 %v1309
        %1372 = vmatpush.xpose.msra.mxu0 %v1306
        %1373 = vmatpush.xpose.msra.mxu0 %v1303
        %1374 = vmatpush.xpose.msra.mxu0 %v1300
        %1375 = vmatpush.xpose.msra.mxu0 %v1297
        %1376 = vmatpush.xpose.msra.mxu0 %v1294
        %1377 = vmatpush.xpose.msra.mxu0 %v1291
        %1378 = vmatpush.xpose.msra.mxu0 %v1288
        %1379 = vmatpush.xpose.msra.mxu0 %v1285
        %1380 = vmatpush.xpose.msra.mxu0 %v1282
        %1381 = vmatpush.xpose.msra.mxu0 %v1279
        %1382 = vmatpush.xpose.msra.mxu0 %v1276
        %1383 = vmatpush.xpose.msra.mxu0 %v1273
        %1384 = vmatmul.f32.gmra.mxu0 %v1270
        %v1385 = vpop.f32.mrf.mxu0
        %v1386 = vadd.f32 %v1266, %v1385
        %1387 = vdwg.mxu0
        %1388 = vmatpush.xpose.msra.mxu0 %v1366
        %1389 = vmatpush.xpose.msra.mxu0 %v1363
        %1390 = vmatpush.xpose.msra.mxu0 %v1360
        %1391 = vmatpush.xpose.msra.mxu0 %v1357
        %1392 = vmatpush.xpose.msra.mxu0 %v1354
        %1393 = vmatpush.xpose.msra.mxu0 %v1351
        %1394 = vmatpush.xpose.msra.mxu0 %v1348
        %1395 = vmatpush.xpose.msra.mxu0 %v1345
        %1396 = vmatpush.xpose.msra.mxu0 %v1342
        %1397 = vmatpush.xpose.msra.mxu0 %v1339
        %1398 = vmatpush.xpose.msra.mxu0 %v1336
        %1399 = vmatpush.xpose.msra.mxu0 %v1333
        %1400 = vmatpush.xpose.msra.mxu0 %v1330
        %1401 = vmatpush.xpose.msra.mxu0 %v1327
        %1402 = vmatpush.xpose.msra.mxu0 %v1324
        %1403 = vmatpush.xpose.msra.mxu0 %v1321
        %1404 = vmatmul.f32.gmra.mxu0 %v1270
        %v1405 = vpop.f32.mrf.mxu0
        %v1406 = vadd.f32 %v1266, %v1405
        %1407 = vdwg.mxu0
        %vm1408 = vcmp.gt.f32.partialorder %v1386, 0.0
        %vm1409 = vcmp.gt.f32.partialorder %v1406, 0.0
        %v1410 = vmul.f32 %v1386, 0.01
        %v1411 = vmul.f32 %v1406, 0.01
        %v1412 = vsel %vm1408, %v1386, %v1410
        %v1413 = vsel %vm1409, %v1406, %v1411
        %v1414 = vld [vmem:[%s7] sm:$0xff]
        %1416 = vset.pattern.permute.xlu0 0
        %1417 = vperm.xlu0 %1416, %v1414
        %v1418 = vpop.permute.xlu0 %1417
        %v1420 = vmul.f32 %v1412, %v1418
        %v1421 = vmul.f32 %v1413, %v1418
        %v1422 = vrot.slane %v1420, 4
        %v1423 = vadd.f32 %v1420, %v1422
        %v1424 = vrot.slane %v1423, 2
        %v1425 = vadd.f32 %v1423, %v1424
        %v1426 = vrot.slane %v1425, 1
        %v1427 = vadd.f32 %v1425, %v1426
        %v1428 = vrot.slane %v1421, 4
        %v1429 = vadd.f32 %v1421, %v1428
        %v1430 = vrot.slane %v1429, 2
        %v1431 = vadd.f32 %v1429, %v1430
        %v1432 = vrot.slane %v1431, 1
        %v1433 = vadd.f32 %v1431, %v1432
        %v1434 = vld [vmem:[#allocation2] sm:$0x1]
        %1436 = vset.pattern.permute.xlu0 0
        %1437 = vperm.xlu0 %1436, %v1434
        %v1438 = vpop.permute.xlu0 %1437
        %v1440 = vperm.slane %v1438, 0
        %v1441 = vadd.f32 %v1427, %v1440
        %v1442 = vadd.f32 %v1433, %v1440
        %v1445 = vrot.slane %v1442, 7
        %vm1446 = vcmask 1040384
        %v1447 = vsel %vm1446, %v1441, %v1445
        %v1449 = vlaneseq
        %vm1450 = vcmp.ge.s32.totalorder %v1449, 0
        %vm1451 = vcmp.lt.s32.totalorder %v1449, 256
        %vm1452 = vmand %vm1450, %vm1451
        %1453 = vst.msk [vmem:[%s328] sm:$0x3] %vm1452, %v1447
        %s1454 = sand.u32 %s227, 1
        %s1455 = scalar_lea.sflag [#allocation4], %s1454
        %s1456 = sand.u32 %s227, 1
        %s1457 = smul.addr %s1456, 2
        %s1458 = scalar_lea.vmem [#allocation3], %s1457
        // Predicated region
        $region57: #{tpu_custom_call.1} parent=55 // pred_check
          %p1459 = pneg %p237
        $region58: #{tpu_custom_call.1} parent=55 // pred_check_branch
          %1461 = sbr.rel (%p1459) target = $region60
        $region59: #{tpu_custom_call.1} parent=55 // pred_region
          %s1462 = smul.u32 2, %s25
          %1464 = vsyncadd %s1455, 0
          %s1465 = scalar_lea.hbm %s9, %s1462
          %s1467 = sshll.u32 %s1458, 4
          %s1468 = int_to_ptr.vmem [resolvable:$true] %s1467
          %s1469 = sshll.u32 %s1465, 4
          %s1470 = int_to_ptr.hbm [resolvable:$true] %s1469
          %1472 = dma.vmem_to_hbm [thread:$0]  %s1468, 32, %s1470, %s1455
        $region60: #{tpu_custom_call.1} parent=55 // pred_fallthru
          _
      $region56: #{tpu_custom_call.1} parent=5 // pred_fallthru
        _
      %p1473 = scmp.le.s32.totalorder 2, %s20
      // Predicated region
      $region61: #{tpu_custom_call.1} parent=5 // pred_check
        %p1474 = pneg %p1473
      $region62: #{tpu_custom_call.1} parent=5 // pred_check_branch
        %1476 = sbr.rel (%p1474) target = $region64
      $region63: #{tpu_custom_call.1} parent=5 // pred_region
        %s1477 = ssub.s32 %s20, 2
        // Predicated region
        $region65: #{tpu_custom_call.1} parent=63 // pred_check
          %p1478 = pneg %p243
        $region66: #{tpu_custom_call.1} parent=63 // pred_check_branch
          %1480 = sbr.rel (%p1478) target = $region68
        $region67: #{tpu_custom_call.1} parent=63 // pred_region
          %s1481 = sand.u32 %s228, 1
          %s1482 = scalar_lea.sflag [#allocation4], %s1481
          %s1483 = sand.u32 %s228, 1
          %s1484 = smul.addr %s1483, 2
          %s1485 = scalar_lea.vmem [#allocation3], %s1484
          %1487 = dma.done %s1482, 32
        $region68: #{tpu_custom_call.1} parent=63 // pred_fallthru
          _
      $region64: #{tpu_custom_call.1} parent=5 // pred_fallthru
        _
    $region6: #{tpu_custom_call.1} parent=1 // loop_footer
      %s24 = sadd.s32 1, %s20
    $region7: #{tpu_custom_call.1} parent=1 // loop_footer_branch
      %19 = sbr.rel target = $region3
    $region8: #{tpu_custom_call.1} parent=1 // loop_exit
      _
    %1488 = vsyncpa [#allocation4], 1
    %s1489 = scalar_lea.sflag [#allocation4], 1
    %1490 = vsyncpa %s1489, 1

</llo_original>
